<compile_context>
chip_gen: v5e
topology: v5e:2x2
jax: 0.10.0
libtpu: 0.0.40
codegen_flags: <defaults>
</compile_context>

<pallas_src>
import jax
import jax.numpy as jnp
from jax.experimental import pallas as pl
from jax.experimental.pallas import tpu as pltpu


def _round_up(n, m):
    return ((n + m - 1) // m) * m


# ----------------------------------------------------------------------------
# Fused Expert FFN kernel: out = SiLU(x @ w1 + b1) @ w2 + b2
# grid = (row_tiles, hidden_tiles); hidden axis is a reduction (f32 accumulator).
# ----------------------------------------------------------------------------
def _expert_kernel(x_ref, w1_ref, b1_ref, w2_ref, b2_ref, o_ref, acc_ref):
    j = pl.program_id(1)

    # First matmul on this hidden slice, f32 accumulation on the MXU.
    h = jnp.dot(x_ref[...], w1_ref[...], preferred_element_type=jnp.float32)
    h = h + b1_ref[...].astype(jnp.float32)
    h = h * jax.nn.sigmoid(h)                       # SiLU (sigmoid runs on the EUP)

    # Second matmul back to C for this hidden slice.
    contrib = jnp.dot(h.astype(w2_ref.dtype), w2_ref[...],
                      preferred_element_type=jnp.float32)

    @pl.when(j == 0)
    def _():
        acc_ref[...] = contrib                      # init with first contribution

    @pl.when(j != 0)
    def _():
        acc_ref[...] += contrib                     # accumulate remaining slices

    @pl.when(j == pl.num_programs(1) - 1)
    def _():
        o_ref[...] = (acc_ref[...] + b2_ref[...].astype(jnp.float32)).astype(o_ref.dtype)


def expert_ffn(x2d, w1, b1, w2, b2, *, tm=256, th=512):
    """x2d: (M, C); w1: (C, Hd); b1: (1, Hd); w2: (Hd, C); b2: (1, C)."""
    M, C = x2d.shape
    Hd = w1.shape[1]

    # --- row tiling: multiple of 8 (sublane), capped at tm; pad M if needed ---
    tm_eff = min(tm, _round_up(M, 8))
    M_pad = _round_up(M, tm_eff)
    if M_pad != M:
        x2d = jnp.pad(x2d, ((0, M_pad - M), (0, 0)))

    # --- hidden tiling: either the full Hd, or a 128-lane multiple; pad Hd if
    #     needed.  Zero-padding Hd is exact: SiLU(x@0 + 0) = 0. ---
    th_eff = min(th, Hd)
    if th_eff < Hd:                                   # keep lane-aligned slices
        th_eff = max(128, (th_eff // 128) * 128)
    Hd_pad = _round_up(Hd, th_eff)
    if Hd_pad != Hd:
        w1 = jnp.pad(w1, ((0, 0), (0, Hd_pad - Hd)))
        b1 = jnp.pad(b1, ((0, 0), (0, Hd_pad - Hd)))
        w2 = jnp.pad(w2, ((0, Hd_pad - Hd), (0, 0)))

    grid = (M_pad // tm_eff, Hd_pad // th_eff)

    # Advisory cost estimate: two matmuls + one sigmoid per hidden element.
    itemsize = jnp.dtype(x2d.dtype).itemsize
    cost = pl.CostEstimate(
        flops=4 * M_pad * C * Hd_pad,
        transcendentals=M_pad * Hd_pad,
        bytes_accessed=itemsize * (M_pad * C * 2 + 2 * C * Hd_pad + Hd_pad + C),
    )

    out = pl.pallas_call(
        _expert_kernel,
        out_shape=jax.ShapeDtypeStruct((M_pad, C), x2d.dtype),
        grid=grid,
        in_specs=[
            pl.BlockSpec((tm_eff, C), lambda i, j: (i, 0)),   # x rows (resident over j)
            pl.BlockSpec((C, th_eff), lambda i, j: (0, j)),   # w1 hidden slice
            pl.BlockSpec((1, th_eff), lambda i, j: (0, j)),   # b1 hidden slice
            pl.BlockSpec((th_eff, C), lambda i, j: (j, 0)),   # w2 hidden slice
            pl.BlockSpec((1, C), lambda i, j: (0, 0)),        # b2 (constant block)
        ],
        out_specs=pl.BlockSpec((tm_eff, C), lambda i, j: (i, 0)),
        scratch_shapes=[pltpu.VMEM((tm_eff, C), jnp.float32)],
        compiler_params=pltpu.CompilerParams(
            dimension_semantics=("parallel", "arbitrary"),
            vmem_limit_bytes=48 * 1024 * 1024,   # safe on v5e/v6e/v7x, roomier than default
        ),
        cost_estimate=cost,
    )(x2d, w1, b1, w2, b2)

    return out[:M]


def expert_forward(x, w1, b1, w2, b2, *, tm=256, th=512):
    """Expert.forward: (B, T, C) -> (B, T, C).  Dropout(p=0 / eval) is identity."""
    # TODO(synk): training-mode dropout (p > 0) not implemented; eval-mode identity.
    B, T, C = x.shape
    y = expert_ffn(x.reshape(B * T, C), w1, b1, w2, b2, tm=tm, th=th)
    return y.reshape(B, T, C)


# ----------------------------------------------------------------------------
if __name__ == "__main__":
    # Small shapes consistent with the module (n_embed=128 keeps lanes dense;
    # T=100 deliberately non-divisible to exercise the padding path).
    C = 128          # n_embed
    B, T = 2, 100    # B*T = 200 rows
    Hd = 4 * C       # 512

    key = jax.random.PRNGKey(0)
    k1, k2, k3, k4, k5 = jax.random.split(key, 5)
    x = jax.random.normal(k1, (B, T, C), jnp.float32)
    w1 = jax.random.normal(k2, (C, Hd), jnp.float32) * 0.02
    b1 = jax.random.normal(k3, (1, Hd), jnp.float32) * 0.01
    w2 = jax.random.normal(k4, (Hd, C), jnp.float32) * 0.02
    b2 = jax.random.normal(k5, (1, C), jnp.float32) * 0.01

    # tm=128 / th=256 so the demo exercises both the parallel row axis and the
    # hidden-dim reduction (accumulator init/accumulate/finalize) with a (2, 2) grid.
    out = expert_forward(x, w1, b1, w2, b2, tm=128, th=256)
    out = jax.block_until_ready(out)

    # Pure-JAX reference (fp32, highest precision) for correctness.
    xf = x.reshape(B * T, C)
    h_ref = jnp.dot(xf, w1, precision=jax.lax.Precision.HIGHEST) + b1
    h_ref = h_ref * jax.nn.sigmoid(h_ref)
    ref = (jnp.dot(h_ref, w2, precision=jax.lax.Precision.HIGHEST) + b2).reshape(B, T, C)

    assert out.shape == (B, T, C) and out.dtype == jnp.float32
    assert bool(jnp.all(jnp.isfinite(out)))
    assert bool(jnp.allclose(out, ref, rtol=1e-3, atol=1e-3))
    print("KERNEL_OK")
</pallas_src>

<mosaic_0001>
module attributes {stable_mosaic.version = 11 : i64} {
  func.func @_expert_kernel(%arg0: i32, %arg1: i32, %arg2: memref<128x128xf32, #tpu.memory_space<vmem>>, %arg3: memref<128x256xf32, #tpu.memory_space<vmem>>, %arg4: memref<1x256xf32, #tpu.memory_space<vmem>>, %arg5: memref<256x128xf32, #tpu.memory_space<vmem>>, %arg6: memref<1x128xf32, #tpu.memory_space<vmem>>, %arg7: memref<128x128xf32, #tpu.memory_space<vmem>>, %arg8: memref<128x128xf32, #tpu.memory_space<vmem>>) attributes {dimension_semantics = [#tpu.dimension_semantics<parallel>, #tpu.dimension_semantics<arbitrary>], iteration_bounds = array<i64: 2, 2>, scalar_prefetch = 0 : i64, scratch_operands = 1 : i64, tpu.core_type = #tpu.core_type<tc>, window_params = [{transform_indices = @transform_0, window_bounds = array<i64: 128, 128>}, {transform_indices = @transform_1, window_bounds = array<i64: 128, 256>}, {transform_indices = @transform_2, window_bounds = array<i64: 1, 256>}, {transform_indices = @transform_3, window_bounds = array<i64: 256, 128>}, {pipeline_mode = #tpu.pipeline_mode<synchronous>, transform_indices = @transform_4, window_bounds = array<i64: 1, 128>}, {transform_indices = @transform_5, window_bounds = array<i64: 128, 128>}]} {
    %c0 = arith.constant 0 : index
    %c0_0 = arith.constant 0 : index
    %0 = vector.load %arg2[%c0, %c0_0] : memref<128x128xf32, #tpu.memory_space<vmem>>, vector<128x128xf32>
    %c0_1 = arith.constant 0 : index
    %c0_2 = arith.constant 0 : index
    %1 = vector.load %arg3[%c0_1, %c0_2] : memref<128x256xf32, #tpu.memory_space<vmem>>, vector<128x256xf32>
    %cst = arith.constant dense<0.000000e+00> : vector<128x256xf32>
    %2 = tpu.matmul %0, %1, %cst {dimension_numbers = #tpu.dot_dimension_numbers<[1], [0], [0], [1], [0, 0, 1, 1], [], []>} : vector<128x128xf32>, vector<128x256xf32>, vector<128x256xf32> -> vector<128x256xf32>
    %c0_3 = arith.constant 0 : index
    %c0_4 = arith.constant 0 : index
    %3 = vector.load %arg4[%c0_3, %c0_4] : memref<1x256xf32, #tpu.memory_space<vmem>>, vector<1x256xf32>
    %4 = vector.broadcast %3 : vector<1x256xf32> to vector<128x256xf32>
    %5 = arith.addf %2, %4 : vector<128x256xf32>
    %6 = arith.negf %5 : vector<128x256xf32>
    %7 = math.exp %6 : vector<128x256xf32>
    %cst_5 = arith.constant 1.000000e+00 : f32
    %8 = vector.broadcast %cst_5 : f32 to vector<128x256xf32>
    %9 = arith.addf %8, %7 : vector<128x256xf32>
    %10 = arith.divf %8, %9 : vector<128x256xf32>
    %11 = arith.mulf %5, %10 : vector<128x256xf32>
    %c0_6 = arith.constant 0 : index
    %c0_7 = arith.constant 0 : index
    %12 = vector.load %arg5[%c0_6, %c0_7] : memref<256x128xf32, #tpu.memory_space<vmem>>, vector<256x128xf32>
    %cst_8 = arith.constant dense<0.000000e+00> : vector<128x128xf32>
    %13 = tpu.matmul %11, %12, %cst_8 {dimension_numbers = #tpu.dot_dimension_numbers<[1], [0], [0], [1], [0, 0, 1, 1], [], []>} : vector<128x256xf32>, vector<256x128xf32>, vector<128x128xf32> -> vector<128x128xf32>
    %c0_i32 = arith.constant 0 : i32
    %14 = arith.cmpi eq, %arg1, %c0_i32 : i32
    %15 = arith.extui %14 : i1 to i32
    %c0_i32_9 = arith.constant 0 : i32
    %16 = arith.cmpi ne, %15, %c0_i32_9 : i32
    scf.if %16 {
      %c0_13 = arith.constant 0 : index
      %c0_14 = arith.constant 0 : index
      %23 = vector.load %arg8[%c0_13, %c0_14] : memref<128x128xf32, #tpu.memory_space<vmem>>, vector<128x128xf32>
      tpu.vector_store %arg8[%c0_13, %c0_14], %13 {strides = array<i32>} : memref<128x128xf32, #tpu.memory_space<vmem>>, vector<128x128xf32>,
    } else {
    }
    %c0_i32_10 = arith.constant 0 : i32
    %17 = arith.cmpi ne, %arg1, %c0_i32_10 : i32
    %18 = arith.extui %17 : i1 to i32
    %c0_i32_11 = arith.constant 0 : i32
    %19 = arith.cmpi ne, %18, %c0_i32_11 : i32
    scf.if %19 {
      %c0_13 = arith.constant 0 : index
      %c0_14 = arith.constant 0 : index
      %23 = vector.load %arg8[%c0_13, %c0_14] : memref<128x128xf32, #tpu.memory_space<vmem>>, vector<128x128xf32>
      %24 = arith.addf %23, %13 : vector<128x128xf32>
      %c0_15 = arith.constant 0 : index
      %c0_16 = arith.constant 0 : index
      %25 = vector.load %arg8[%c0_15, %c0_16] : memref<128x128xf32, #tpu.memory_space<vmem>>, vector<128x128xf32>
      tpu.vector_store %arg8[%c0_15, %c0_16], %24 {strides = array<i32>} : memref<128x128xf32, #tpu.memory_space<vmem>>, vector<128x128xf32>,
    } else {
    }
    %c1_i32 = arith.constant 1 : i32
    %20 = arith.cmpi eq, %arg1, %c1_i32 : i32
    %21 = arith.extui %20 : i1 to i32
    %c0_i32_12 = arith.constant 0 : i32
    %22 = arith.cmpi ne, %21, %c0_i32_12 : i32
    scf.if %22 {
      %c0_13 = arith.constant 0 : index
      %c0_14 = arith.constant 0 : index
      %23 = vector.load %arg8[%c0_13, %c0_14] : memref<128x128xf32, #tpu.memory_space<vmem>>, vector<128x128xf32>
      %c0_15 = arith.constant 0 : index
      %c0_16 = arith.constant 0 : index
      %24 = vector.load %arg6[%c0_15, %c0_16] : memref<1x128xf32, #tpu.memory_space<vmem>>, vector<1x128xf32>
      %25 = vector.broadcast %24 : vector<1x128xf32> to vector<128x128xf32>
      %26 = arith.addf %23, %25 : vector<128x128xf32>
      %c0_17 = arith.constant 0 : index
      %c0_18 = arith.constant 0 : index
      %27 = vector.load %arg7[%c0_17, %c0_18] : memref<128x128xf32, #tpu.memory_space<vmem>>, vector<128x128xf32>
      tpu.vector_store %arg7[%c0_17, %c0_18], %26 {strides = array<i32>} : memref<128x128xf32, #tpu.memory_space<vmem>>, vector<128x128xf32>,
    } else {
    }
    return
  }
  func.func @transform_0(%arg0: i32, %arg1: i32) -> (i32, i32) {
    %c0_i32 = arith.constant 0 : i32
    %c0_i32_0 = arith.constant 0 : i32
    return %arg0, %c0_i32 : i32, i32
  }
  func.func @transform_1(%arg0: i32, %arg1: i32) -> (i32, i32) {
    %c0_i32 = arith.constant 0 : i32
    %c0_i32_0 = arith.constant 0 : i32
    return %c0_i32, %arg1 : i32, i32
  }
  func.func @transform_2(%arg0: i32, %arg1: i32) -> (i32, i32) {
    %c0_i32 = arith.constant 0 : i32
    %c0_i32_0 = arith.constant 0 : i32
    return %c0_i32, %arg1 : i32, i32
  }
  func.func @transform_3(%arg0: i32, %arg1: i32) -> (i32, i32) {
    %c0_i32 = arith.constant 0 : i32
    %c0_i32_0 = arith.constant 0 : i32
    return %arg1, %c0_i32 : i32, i32
  }
  func.func @transform_4(%arg0: i32, %arg1: i32) -> (i32, i32) {
    %c0_i32 = arith.constant 0 : i32
    %c0_i32_0 = arith.constant 0 : i32
    %c0_i32_1 = arith.constant 0 : i32
    return %c0_i32, %c0_i32_0 : i32, i32
  }
  func.func @transform_5(%arg0: i32, %arg1: i32) -> (i32, i32) {
    %c0_i32 = arith.constant 0 : i32
    %c0_i32_0 = arith.constant 0 : i32
    return %arg0, %c0_i32 : i32, i32
  }
}

</mosaic_0001>

<llo_original>
// kernel: tpu_custom_call.1
$region0: #{tpu_custom_call.1}
  #allocation0 [shape = 'u32[]', space=smem, size = 0x4, offset = 0x4, fixed_abs, tag = 'smem constant byte address 0x4 - core index']
  #allocation1 [shape = 'u32[72,128]{1,0:T(1,128)}', space=vmem, size = 0x9000, scoped, tag = 'internal scratch']
  #allocation2 [shape = 'f32[128,128]{1,0:T(8,128)}', space=vmem, size = 0x10000, scoped, tag = 'scratch operand']
  %s0 = inlined_call_operand.hbm [shape: f32[256,128], index: 0, kind: input, shape index: {}]
  %s1 = inlined_call_operand.hbm [shape: f32[128,512], index: 1, kind: input, shape index: {}]
  %s2 = inlined_call_operand.hbm [shape: f32[1,512], index: 2, kind: input, shape index: {}]
  %s3 = inlined_call_operand.hbm [shape: f32[512,128], index: 3, kind: input, shape index: {}]
  %s4 = inlined_call_operand.vmem [shape: f32[1,128], index: 4, kind: input, shape index: {}]
  %s5 = inlined_call_operand.hbm [shape: f32[256,128], index: 5, kind: output, shape index: {}]
  %s6 = sld [smem:[#allocation0]]
  $region81: #{tpu_custom_call.1} parent=0
    _
  %s8 = ssub.s32 1, %s6
  %s9 = scalar_select 0, %s8, %s6
  $region1: #{tpu_custom_call.1} parent=0
    #allocation3 [shape = 'u8[131072]{0}', space=vmem, size = 0x20000, scoped, tag = 'input window, operand 0']
    #allocation4 [shape = 's32[2]{0}', space=sflag, size = 0x8, scoped, tag = 'scoped memory for tpu_custom_call.1']
    #allocation5 [shape = 's32[2]{0}', space=sflag, size = 0x8, scoped, tag = 'scoped memory for tpu_custom_call.1']
    #allocation6 [shape = 'u8[262144]{0}', space=vmem, size = 0x40000, scoped, tag = 'input window, operand 1']
    #allocation7 [shape = 's32[2]{0}', space=sflag, size = 0x8, scoped, tag = 'scoped memory for tpu_custom_call.1']
    #allocation8 [shape = 'u8[2048]{0}', space=vmem, size = 0x800, scoped, tag = 'input window, operand 2']
    #allocation9 [shape = 'u8[262144]{0}', space=vmem, size = 0x40000, scoped, tag = 'input window, operand 3']
    #allocation10 [shape = 's32[2]{0}', space=sflag, size = 0x8, scoped, tag = 'scoped memory for tpu_custom_call.1']
    #allocation11 [shape = 'u8[131072]{0}', space=vmem, size = 0x20000, scoped, tag = 'output window, operand 0']
    %10 = vsyncpa [#allocation4], 0
    %s11 = scalar_lea.sflag [#allocation4], 1
    %12 = vsyncpa %s11, 0
    %13 = vsyncpa [#allocation7], 0
    %s14 = scalar_lea.sflag [#allocation7], 1
    %15 = vsyncpa %s14, 0
    %16 = vsyncpa [#allocation10], 0
    %s17 = scalar_lea.sflag [#allocation10], 1
    %18 = vsyncpa %s17, 0
    %19 = vsyncpa [#allocation5], 0
    %s20 = scalar_lea.sflag [#allocation5], 1
    %21 = vsyncpa %s20, 0
    loop: start=0, step=1, limit=6
    $region2: #{tpu_custom_call.1} parent=1 // loop_pre_header
      _
    $region3: #{tpu_custom_call.1} parent=1 // loop_header
      %s23 = sphi 0, %s27
      %p24 = scmp.ge.s32.totalorder %s23, 6
      %s30 = sphi 0, %s42
      %s31 = sphi 0, %s38
      %s32 = sphi 0, %s30
      %s33 = sphi 0, %s31
      %s34 = sphi 0, %s32
      %s35 = sphi 0, %s33
      %s45 = sphi 0, %s47
      %s48 = sphi 0, %s45
      %s49 = sphi 0, %s48
      %s65 = sphi 0, %s49
      %s71 = sphi 0, %s73
      %s74 = sphi 0, %s71
      %s75 = sphi 0, %s74
      %s91 = sphi 0, %s75
      %s97 = sphi 0, %s99
      %s100 = sphi 0, %s97
      %s101 = sphi 0, %s100
      %s117 = sphi 0, %s101
      %s123 = sphi 0, %s125
      %s126 = sphi 0, %s123
      %s127 = sphi 0, %s126
      %s143 = sphi 0, %s127
      %s147 = sphi 0, %s147
      %s149 = sphi 0, %s147
      %s150 = sphi 0, %s149
      %s164 = sphi 0, %s150
      %s170 = sphi 0, %s172
      %s173 = sphi 0, %s170
      %s174 = sphi 0, %s173
      %s190 = sphi 0, %s174
    $region4: #{tpu_custom_call.1} parent=1 // loop_header_branch
      %26 = sbr.rel (%p24) target = $region8
    $region5: #{tpu_custom_call.1} parent=1 // loop_body
      %s28 = ssub.s32 %s23, 1
      %s29 = ssub.s32 %s23, 2
      %s36 = sadd.s32 1, %s31
      %p37 = scmp.ge.s32.totalorder %s36, 2
      %s38 = scalar_select %p37, 0, %s36
      %s39 = sadd.s32 1, %s30
      %s40 = scalar_select %p37, %s39, %s30
      %p41 = scmp.ge.s32.totalorder %s40, 2
      %s42 = scalar_select %p41, 0, %s40
      %s43 = ssub.s32 %s30, %s42
      %p44 = scmp.eq.s32.totalorder %s43, 0
      %s46 = sadd.s32 %s45, 1
      %s47 = scalar_select %p44, %s45, %s46
      %p50 = pneg %p44
      %p51 = scmp.eq.s32.totalorder %s23, 3
      %p52 = por %p50, %p51
      %p53 = scmp.ne.s32.totalorder %s45, %s48
      %p54 = scmp.eq.s32.totalorder %s23, 0
      %p55 = por %p53, %p54
      %p56 = scmp.ne.s32.totalorder %s45, %s48
      %p57 = scmp.eq.s32.totalorder %s28, 3
      %p58 = por %p56, %p57
      %p59 = scmp.ne.s32.totalorder %s48, %s49
      %p60 = scmp.eq.s32.totalorder %s28, 0
      %p61 = por %p59, %p60
      %p62 = scmp.ne.s32.totalorder %s48, %s49
      %p63 = scmp.eq.s32.totalorder %s29, 3
      %p64 = por %p62, %p63
      %p66 = scmp.ne.s32.totalorder %s49, %s65
      %p67 = scmp.eq.s32.totalorder %s29, 0
      %p68 = por %p66, %p67
      %s69 = ssub.s32 %s31, %s38
      %p70 = scmp.eq.s32.totalorder %s69, 0
      %s72 = sadd.s32 %s71, 1
      %s73 = scalar_select %p70, %s71, %s72
      %p76 = pneg %p70
      %p77 = scmp.eq.s32.totalorder %s23, 3
      %p78 = por %p76, %p77
      %p79 = scmp.ne.s32.totalorder %s71, %s74
      %p80 = scmp.eq.s32.totalorder %s23, 0
      %p81 = por %p79, %p80
      %p82 = scmp.ne.s32.totalorder %s71, %s74
      %p83 = scmp.eq.s32.totalorder %s28, 3
      %p84 = por %p82, %p83
      %p85 = scmp.ne.s32.totalorder %s74, %s75
      %p86 = scmp.eq.s32.totalorder %s28, 0
      %p87 = por %p85, %p86
      %p88 = scmp.ne.s32.totalorder %s74, %s75
      %p89 = scmp.eq.s32.totalorder %s29, 3
      %p90 = por %p88, %p89
      %p92 = scmp.ne.s32.totalorder %s75, %s91
      %p93 = scmp.eq.s32.totalorder %s29, 0
      %p94 = por %p92, %p93
      %s95 = ssub.s32 %s31, %s38
      %p96 = scmp.eq.s32.totalorder %s95, 0
      %s98 = sadd.s32 %s97, 1
      %s99 = scalar_select %p96, %s97, %s98
      %p102 = pneg %p96
      %p103 = scmp.eq.s32.totalorder %s23, 3
      %p104 = por %p102, %p103
      %p105 = scmp.ne.s32.totalorder %s97, %s100
      %p106 = scmp.eq.s32.totalorder %s23, 0
      %p107 = por %p105, %p106
      %p108 = scmp.ne.s32.totalorder %s97, %s100
      %p109 = scmp.eq.s32.totalorder %s28, 3
      %p110 = por %p108, %p109
      %p111 = scmp.ne.s32.totalorder %s100, %s101
      %p112 = scmp.eq.s32.totalorder %s28, 0
      %p113 = por %p111, %p112
      %p114 = scmp.ne.s32.totalorder %s100, %s101
      %p115 = scmp.eq.s32.totalorder %s29, 3
      %p116 = por %p114, %p115
      %p118 = scmp.ne.s32.totalorder %s101, %s117
      %p119 = scmp.eq.s32.totalorder %s29, 0
      %p120 = por %p118, %p119
      %s121 = ssub.s32 %s31, %s38
      %p122 = scmp.eq.s32.totalorder %s121, 0
      %s124 = sadd.s32 %s123, 1
      %s125 = scalar_select %p122, %s123, %s124
      %p128 = pneg %p122
      %p129 = scmp.eq.s32.totalorder %s23, 3
      %p130 = por %p128, %p129
      %p131 = scmp.ne.s32.totalorder %s123, %s126
      %p132 = scmp.eq.s32.totalorder %s23, 0
      %p133 = por %p131, %p132
      %p134 = scmp.ne.s32.totalorder %s123, %s126
      %p135 = scmp.eq.s32.totalorder %s28, 3
      %p136 = por %p134, %p135
      %p137 = scmp.ne.s32.totalorder %s126, %s127
      %p138 = scmp.eq.s32.totalorder %s28, 0
      %p139 = por %p137, %p138
      %p140 = scmp.ne.s32.totalorder %s126, %s127
      %p141 = scmp.eq.s32.totalorder %s29, 3
      %p142 = por %p140, %p141
      %p144 = scmp.ne.s32.totalorder %s127, %s143
      %p145 = scmp.eq.s32.totalorder %s29, 0
      %p146 = por %p144, %p145
      %s148 = sadd.s32 %s147, 1
      %p151 = scmp.eq.s32.totalorder %s23, 3
      %p152 = scmp.ne.s32.totalorder %s147, %s149
      %p153 = scmp.eq.s32.totalorder %s23, 0
      %p154 = por %p152, %p153
      %p155 = scmp.ne.s32.totalorder %s147, %s149
      %p156 = scmp.eq.s32.totalorder %s28, 3
      %p157 = por %p155, %p156
      %p158 = scmp.ne.s32.totalorder %s149, %s150
      %p159 = scmp.eq.s32.totalorder %s28, 0
      %p160 = por %p158, %p159
      %p161 = scmp.ne.s32.totalorder %s149, %s150
      %p162 = scmp.eq.s32.totalorder %s29, 3
      %p163 = por %p161, %p162
      %p165 = scmp.ne.s32.totalorder %s150, %s164
      %p166 = scmp.eq.s32.totalorder %s29, 0
      %p167 = por %p165, %p166
      %s168 = ssub.s32 %s30, %s42
      %p169 = scmp.eq.s32.totalorder %s168, 0
      %s171 = sadd.s32 %s170, 1
      %s172 = scalar_select %p169, %s170, %s171
      %p175 = pneg %p169
      %p176 = scmp.eq.s32.totalorder %s23, 3
      %p177 = por %p175, %p176
      %p178 = scmp.ne.s32.totalorder %s170, %s173
      %p179 = scmp.eq.s32.totalorder %s23, 0
      %p180 = por %p178, %p179
      %p181 = scmp.ne.s32.totalorder %s170, %s173
      %p182 = scmp.eq.s32.totalorder %s28, 3
      %p183 = por %p181, %p182
      %p184 = scmp.ne.s32.totalorder %s173, %s174
      %p185 = scmp.eq.s32.totalorder %s28, 0
      %p186 = por %p184, %p185
      %p187 = scmp.ne.s32.totalorder %s173, %s174
      %p188 = scmp.eq.s32.totalorder %s29, 3
      %p189 = por %p187, %p188
      %p191 = scmp.ne.s32.totalorder %s174, %s190
      %p192 = scmp.eq.s32.totalorder %s29, 0
      %p193 = por %p191, %p192
      %p194 = scmp.le.s32.totalorder 1, %s23
      %p195 = scmp.lt.s32.totalorder %s23, 5
      %p196 = pnand %p194, %p195
      %p197 = pneg %p196
      // Predicated region
      $region9: #{tpu_custom_call.1} parent=5 // pred_check
        _
      $region10: #{tpu_custom_call.1} parent=5 // pred_check_branch
        %199 = sbr.rel (%p196) target = $region12
      $region11: #{tpu_custom_call.1} parent=5 // pred_region
        %s200 = ssub.s32 %s23, 1
        // Predicated region
        $region13: #{tpu_custom_call.1} parent=11 // pred_check
          %p201 = pneg %p160
        $region14: #{tpu_custom_call.1} parent=11 // pred_check_branch
          %203 = sbr.rel (%p201) target = $region16
        $region15: #{tpu_custom_call.1} parent=11 // pred_region
          _
        $region16: #{tpu_custom_call.1} parent=11 // pred_fallthru
          _
      $region12: #{tpu_custom_call.1} parent=5 // pred_fallthru
        _
      %p204 = scmp.lt.s32.totalorder %s23, 4
      // Predicated region
      $region17: #{tpu_custom_call.1} parent=5 // pred_check
        %p205 = pneg %p204
      $region18: #{tpu_custom_call.1} parent=5 // pred_check_branch
        %207 = sbr.rel (%p205) target = $region20
      $region19: #{tpu_custom_call.1} parent=5 // pred_region
        // Predicated region
        $region21: #{tpu_custom_call.1} parent=19 // pred_check
          %p208 = pneg %p55
        $region22: #{tpu_custom_call.1} parent=19 // pred_check_branch
          %210 = sbr.rel (%p208) target = $region24
        $region23: #{tpu_custom_call.1} parent=19 // pred_region
          %s211 = sand.u32 %s45, 1
          %s212 = scalar_lea.sflag [#allocation4], %s211
          %s213 = sand.u32 %s45, 1
          %s214 = smul.addr %s213, 128
          %s215 = scalar_lea.vmem [#allocation3], %s214
          %s216 = smul.u32 16, %s30
          %218 = vsyncadd %s212, 0
          %s219 = smul.addr %s216, 8
          %s220 = scalar_lea.hbm %s0, %s219
          %s221 = sshll.u32 %s220, 4
          %s222 = int_to_ptr.hbm [resolvable:$true] %s221
          %s223 = sshll.u32 %s215, 4
          %s224 = int_to_ptr.vmem [resolvable:$true] %s223
          %229 = dma.hbm_to_vmem [thread:$0]  %s222, 2048, %s224, %s212, 128, 128, 8
        $region24: #{tpu_custom_call.1} parent=19 // pred_fallthru
          _
        // Predicated region
        $region25: #{tpu_custom_call.1} parent=19 // pred_check
          %p230 = pneg %p81
        $region26: #{tpu_custom_call.1} parent=19 // pred_check_branch
          %232 = sbr.rel (%p230) target = $region28
        $region27: #{tpu_custom_call.1} parent=19 // pred_region
          %s233 = sand.u32 %s23, 1
          %s234 = scalar_lea.sflag [#allocation7], %s233
          %s235 = sand.u32 %s71, 1
          %s236 = smul.addr %s235, 256
          %s237 = scalar_lea.vmem [#allocation6], %s236
          %s238 = smul.u32 2, %s31
          %240 = vsyncadd %s234, 0
          %s241 = smul.addr %s238, 8
          %s242 = scalar_lea.hbm %s1, %s241
          %s243 = sshll.u32 %s242, 4
          %s244 = int_to_ptr.hbm [resolvable:$true] %s243
          %s245 = sshll.u32 %s237, 4
          %s246 = int_to_ptr.vmem [resolvable:$true] %s245
          %251 = dma.hbm_to_vmem [thread:$0]  %s244, 4096, %s246, %s234, 512, 256, 16
        $region28: #{tpu_custom_call.1} parent=19 // pred_fallthru
          _
        // Predicated region
        $region29: #{tpu_custom_call.1} parent=19 // pred_check
          %p252 = pneg %p107
        $region30: #{tpu_custom_call.1} parent=19 // pred_check_branch
          %254 = sbr.rel (%p252) target = $region32
        $region31: #{tpu_custom_call.1} parent=19 // pred_region
          %s255 = sand.u32 %s23, 1
          %s256 = scalar_lea.sflag [#allocation7], %s255
          %s257 = sand.u32 %s97, 1
          %s258 = smul.addr %s257, 2
          %s259 = scalar_lea.vmem [#allocation8], %s258
          %s260 = smul.u32 2, %s31
          %262 = vsyncadd %s256, 0
          %s263 = scalar_lea.hbm %s2, %s260
          %s265 = sshll.u32 %s263, 4
          %s266 = int_to_ptr.hbm [resolvable:$true] %s265
          %s267 = sshll.u32 %s259, 4
          %s268 = int_to_ptr.vmem [resolvable:$true] %s267
          %270 = dma.hbm_to_vmem [thread:$0]  %s266, 32, %s268, %s256
        $region32: #{tpu_custom_call.1} parent=19 // pred_fallthru
          _
        // Predicated region
        $region33: #{tpu_custom_call.1} parent=19 // pred_check
          %p271 = pneg %p133
        $region34: #{tpu_custom_call.1} parent=19 // pred_check_branch
          %273 = sbr.rel (%p271) target = $region36
        $region35: #{tpu_custom_call.1} parent=19 // pred_region
          %s274 = sand.u32 %s123, 1
          %s275 = scalar_lea.sflag [#allocation10], %s274
          %s276 = sand.u32 %s123, 1
          %s277 = smul.addr %s276, 256
          %s278 = scalar_lea.vmem [#allocation9], %s277
          %s279 = smul.u32 32, %s31
          %281 = vsyncadd %s275, 0
          %s282 = smul.addr %s279, 8
          %s283 = scalar_lea.hbm %s3, %s282
          %s284 = sshll.u32 %s283, 4
          %s285 = int_to_ptr.hbm [resolvable:$true] %s284
          %s286 = sshll.u32 %s278, 4
          %s287 = int_to_ptr.vmem [resolvable:$true] %s286
          %292 = dma.hbm_to_vmem [thread:$0]  %s285, 4096, %s287, %s275, 128, 128, 8
        $region36: #{tpu_custom_call.1} parent=19 // pred_fallthru
          _
      $region20: #{tpu_custom_call.1} parent=5 // pred_fallthru
        _
      %p293 = scmp.le.s32.totalorder 1, %s23
      %p294 = scmp.lt.s32.totalorder %s23, 5
      %p295 = pnand %p293, %p294
      %p296 = pneg %p295
      // Predicated region
      $region37: #{tpu_custom_call.1} parent=5 // pred_check
        _
      $region38: #{tpu_custom_call.1} parent=5 // pred_check_branch
        %298 = sbr.rel (%p295) target = $region40
      $region39: #{tpu_custom_call.1} parent=5 // pred_region
        %s299 = ssub.s32 %s23, 1
        %s300 = sand.u32 %s48, 1
        %s301 = scalar_lea.sflag [#allocation4], %s300
        %s302 = sand.u32 %s48, 1
        %s303 = smul.addr %s302, 128
        %s304 = scalar_lea.vmem [#allocation3], %s303
        // Predicated region
        $region41: #{tpu_custom_call.1} parent=39 // pred_check
          %p305 = pneg %p61
        $region42: #{tpu_custom_call.1} parent=39 // pred_check_branch
          %307 = sbr.rel (%p305) target = $region44
        $region43: #{tpu_custom_call.1} parent=39 // pred_region
          %309 = dma.done %s301, 2048
        $region44: #{tpu_custom_call.1} parent=39 // pred_fallthru
          _
        %s310 = sand.u32 %s28, 1
        %s311 = scalar_lea.sflag [#allocation7], %s310
        %s312 = sand.u32 %s74, 1
        %s313 = smul.addr %s312, 256
        %s314 = scalar_lea.vmem [#allocation6], %s313
        // Predicated region
        $region45: #{tpu_custom_call.1} parent=39 // pred_check
          %p315 = pneg %p87
        $region46: #{tpu_custom_call.1} parent=39 // pred_check_branch
          %317 = sbr.rel (%p315) target = $region48
        $region47: #{tpu_custom_call.1} parent=39 // pred_region
          %319 = dma.done %s311, 4096
        $region48: #{tpu_custom_call.1} parent=39 // pred_fallthru
          _
        %s320 = sand.u32 %s28, 1
        %s321 = scalar_lea.sflag [#allocation7], %s320
        %s322 = sand.u32 %s100, 1
        %s323 = smul.addr %s322, 2
        %s324 = scalar_lea.vmem [#allocation8], %s323
        // Predicated region
        $region49: #{tpu_custom_call.1} parent=39 // pred_check
          %p325 = pneg %p113
        $region50: #{tpu_custom_call.1} parent=39 // pred_check_branch
          %327 = sbr.rel (%p325) target = $region52
        $region51: #{tpu_custom_call.1} parent=39 // pred_region
          %329 = dma.done %s321, 32
        $region52: #{tpu_custom_call.1} parent=39 // pred_fallthru
          _
        %s330 = sand.u32 %s126, 1
        %s331 = scalar_lea.sflag [#allocation10], %s330
        %s332 = sand.u32 %s126, 1
        %s333 = smul.addr %s332, 256
        %s334 = scalar_lea.vmem [#allocation9], %s333
        // Predicated region
        $region53: #{tpu_custom_call.1} parent=39 // pred_check
          %p335 = pneg %p139
        $region54: #{tpu_custom_call.1} parent=39 // pred_check_branch
          %337 = sbr.rel (%p335) target = $region56
        $region55: #{tpu_custom_call.1} parent=39 // pred_region
          %339 = dma.done %s331, 4096
        $region56: #{tpu_custom_call.1} parent=39 // pred_fallthru
          _
        %s340 = sand.u32 %s48, 1
        %s341 = scalar_lea.sflag [#allocation4], %s340
        %s342 = sand.u32 %s48, 1
        %s343 = smul.addr %s342, 128
        %s344 = scalar_lea.vmem [#allocation3], %s343
        %p345 = pneg %p61
        %p346 = pneg %p58
        %s347 = sand.u32 %s28, 1
        %s348 = scalar_lea.sflag [#allocation7], %s347
        %s349 = sand.u32 %s74, 1
        %s350 = smul.addr %s349, 256
        %s351 = scalar_lea.vmem [#allocation6], %s350
        %p352 = pneg %p87
        %p353 = pneg %p84
        %s354 = sand.u32 %s28, 1
        %s355 = scalar_lea.sflag [#allocation7], %s354
        %s356 = sand.u32 %s100, 1
        %s357 = smul.addr %s356, 2
        %s358 = scalar_lea.vmem [#allocation8], %s357
        %p359 = pneg %p113
        %p360 = pneg %p110
        %s361 = sand.u32 %s126, 1
        %s362 = scalar_lea.sflag [#allocation10], %s361
        %s363 = sand.u32 %s126, 1
        %s364 = smul.addr %s363, 256
        %s365 = scalar_lea.vmem [#allocation9], %s364
        %p366 = pneg %p139
        %p367 = pneg %p136
        %p368 = pneg %p160
        %p369 = pneg %p157
        %p370 = pneg %p186
        %p371 = pneg %p183
        %s372 = sand.u32 %s173, 1
        %s373 = scalar_lea.sflag [#allocation5], %s372
        %s374 = sand.u32 %s173, 1
        %s375 = smul.addr %s374, 128
        %s376 = scalar_lea.vmem [#allocation11], %s375
        %s377 = smul.u32 16, %s32
        %s378 = smul.u32 2, %s33
        %s379 = smul.u32 2, %s33
        %s380 = smul.u32 32, %s33
        %s381 = smul.u32 16, %s32
        %v382 = vld [vmem:[%s304] sm:$0xff]
        %v383 = vld [vmem:[%s304 + $0x8] sm:$0xff]
        %v384 = vld [vmem:[%s304 + $0x10] sm:$0xff]
        %v385 = vld [vmem:[%s304 + $0x18] sm:$0xff]
        %v386 = vld [vmem:[%s304 + $0x20] sm:$0xff]
        %v387 = vld [vmem:[%s304 + $0x28] sm:$0xff]
        %v388 = vld [vmem:[%s304 + $0x30] sm:$0xff]
        %v389 = vld [vmem:[%s304 + $0x38] sm:$0xff]
        %v390 = vld [vmem:[%s304 + $0x40] sm:$0xff]
        %v391 = vld [vmem:[%s304 + $0x48] sm:$0xff]
        %v392 = vld [vmem:[%s304 + $0x50] sm:$0xff]
        %v393 = vld [vmem:[%s304 + $0x58] sm:$0xff]
        %v394 = vld [vmem:[%s304 + $0x60] sm:$0xff]
        %v395 = vld [vmem:[%s304 + $0x68] sm:$0xff]
        %v396 = vld [vmem:[%s304 + $0x70] sm:$0xff]
        %v397 = vld [vmem:[%s304 + $0x78] sm:$0xff]
        %v398 = vld [vmem:[%s314] sm:$0xff]
        %v399 = vld [vmem:[%s314 + $0x8] sm:$0xff]
        %v400 = vld [vmem:[%s314 + $0x10] sm:$0xff]
        %v401 = vld [vmem:[%s314 + $0x18] sm:$0xff]
        %v402 = vld [vmem:[%s314 + $0x20] sm:$0xff]
        %v403 = vld [vmem:[%s314 + $0x28] sm:$0xff]
        %v404 = vld [vmem:[%s314 + $0x30] sm:$0xff]
        %v405 = vld [vmem:[%s314 + $0x38] sm:$0xff]
        %v406 = vld [vmem:[%s314 + $0x40] sm:$0xff]
        %v407 = vld [vmem:[%s314 + $0x48] sm:$0xff]
        %v408 = vld [vmem:[%s314 + $0x50] sm:$0xff]
        %v409 = vld [vmem:[%s314 + $0x58] sm:$0xff]
        %v410 = vld [vmem:[%s314 + $0x60] sm:$0xff]
        %v411 = vld [vmem:[%s314 + $0x68] sm:$0xff]
        %v412 = vld [vmem:[%s314 + $0x70] sm:$0xff]
        %v413 = vld [vmem:[%s314 + $0x78] sm:$0xff]
        %v414 = vld [vmem:[%s314 + $0x80] sm:$0xff]
        %v415 = vld [vmem:[%s314 + $0x88] sm:$0xff]
        %v416 = vld [vmem:[%s314 + $0x90] sm:$0xff]
        %v417 = vld [vmem:[%s314 + $0x98] sm:$0xff]
        %v418 = vld [vmem:[%s314 + $0xa0] sm:$0xff]
        %v419 = vld [vmem:[%s314 + $0xa8] sm:$0xff]
        %v420 = vld [vmem:[%s314 + $0xb0] sm:$0xff]
        %v421 = vld [vmem:[%s314 + $0xb8] sm:$0xff]
        %v422 = vld [vmem:[%s314 + $0xc0] sm:$0xff]
        %v423 = vld [vmem:[%s314 + $0xc8] sm:$0xff]
        %v424 = vld [vmem:[%s314 + $0xd0] sm:$0xff]
        %v425 = vld [vmem:[%s314 + $0xd8] sm:$0xff]
        %v426 = vld [vmem:[%s314 + $0xe0] sm:$0xff]
        %v427 = vld [vmem:[%s314 + $0xe8] sm:$0xff]
        %v428 = vld [vmem:[%s314 + $0xf0] sm:$0xff]
        %v429 = vld [vmem:[%s314 + $0xf8] sm:$0xff]
        %v430 = vld [vmem:[%s324] sm:$0x3]
        %v432 = vperm.slane %v430, 0
        %v433 = vperm.slane %v430, 1
        %436 = vmatpush.msra.mxu0 %v428
        %437 = vmatpush.msra.mxu0 %v426
        %438 = vmatpush.msra.mxu0 %v424
        %439 = vmatpush.msra.mxu0 %v422
        %440 = vmatpush.msra.mxu0 %v420
        %441 = vmatpush.msra.mxu0 %v418
        %442 = vmatpush.msra.mxu0 %v416
        %443 = vmatpush.msra.mxu0 %v414
        %444 = vmatpush.msra.mxu0 %v412
        %445 = vmatpush.msra.mxu0 %v410
        %446 = vmatpush.msra.mxu0 %v408
        %447 = vmatpush.msra.mxu0 %v406
        %448 = vmatpush.msra.mxu0 %v404
        %449 = vmatpush.msra.mxu0 %v402
        %450 = vmatpush.msra.mxu0 %v400
        %451 = vmatpush.msra.mxu0 %v398
        %452 = vmatmul.f32.gmra.mxu0 %v382
        %v453 = vpop.f32.mrf.mxu0
        %v454 = vadd.f32 %v432, %v453
        %455 = vmatmul.f32.gmra.mxu0 %v383
        %v456 = vpop.f32.mrf.mxu0
        %v457 = vadd.f32 %v432, %v456
        %458 = vmatmul.f32.gmra.mxu0 %v384
        %v459 = vpop.f32.mrf.mxu0
        %v460 = vadd.f32 %v432, %v459
        %461 = vmatmul.f32.gmra.mxu0 %v385
        %v462 = vpop.f32.mrf.mxu0
        %v463 = vadd.f32 %v432, %v462
        %464 = vmatmul.f32.gmra.mxu0 %v386
        %v465 = vpop.f32.mrf.mxu0
        %v466 = vadd.f32 %v432, %v465
        %467 = vmatmul.f32.gmra.mxu0 %v387
        %v468 = vpop.f32.mrf.mxu0
        %v469 = vadd.f32 %v432, %v468
        %470 = vmatmul.f32.gmra.mxu0 %v388
        %v471 = vpop.f32.mrf.mxu0
        %v472 = vadd.f32 %v432, %v471
        %473 = vmatmul.f32.gmra.mxu0 %v389
        %v474 = vpop.f32.mrf.mxu0
        %v475 = vadd.f32 %v432, %v474
        %476 = vmatmul.f32.gmra.mxu0 %v390
        %v477 = vpop.f32.mrf.mxu0
        %v478 = vadd.f32 %v432, %v477
        %479 = vmatmul.f32.gmra.mxu0 %v391
        %v480 = vpop.f32.mrf.mxu0
        %v481 = vadd.f32 %v432, %v480
        %482 = vmatmul.f32.gmra.mxu0 %v392
        %v483 = vpop.f32.mrf.mxu0
        %v484 = vadd.f32 %v432, %v483
        %485 = vmatmul.f32.gmra.mxu0 %v393
        %v486 = vpop.f32.mrf.mxu0
        %v487 = vadd.f32 %v432, %v486
        %488 = vmatmul.f32.gmra.mxu0 %v394
        %v489 = vpop.f32.mrf.mxu0
        %v490 = vadd.f32 %v432, %v489
        %491 = vmatmul.f32.gmra.mxu0 %v395
        %v492 = vpop.f32.mrf.mxu0
        %v493 = vadd.f32 %v432, %v492
        %494 = vmatmul.f32.gmra.mxu0 %v396
        %v495 = vpop.f32.mrf.mxu0
        %v496 = vadd.f32 %v432, %v495
        %497 = vmatmul.f32.gmra.mxu0 %v397
        %v498 = vpop.f32.mrf.mxu0
        %v499 = vadd.f32 %v432, %v498
        %500 = vdwg.mxu0
        %501 = vmatpush.msra.mxu0 %v429
        %502 = vmatpush.msra.mxu0 %v427
        %503 = vmatpush.msra.mxu0 %v425
        %504 = vmatpush.msra.mxu0 %v423
        %505 = vmatpush.msra.mxu0 %v421
        %506 = vmatpush.msra.mxu0 %v419
        %507 = vmatpush.msra.mxu0 %v417
        %508 = vmatpush.msra.mxu0 %v415
        %509 = vmatpush.msra.mxu0 %v413
        %510 = vmatpush.msra.mxu0 %v411
        %511 = vmatpush.msra.mxu0 %v409
        %512 = vmatpush.msra.mxu0 %v407
        %513 = vmatpush.msra.mxu0 %v405
        %514 = vmatpush.msra.mxu0 %v403
        %515 = vmatpush.msra.mxu0 %v401
        %516 = vmatpush.msra.mxu0 %v399
        %517 = vmatmul.f32.gmra.mxu0 %v382
        %v518 = vpop.f32.mrf.mxu0
        %v519 = vadd.f32 %v433, %v518
        %520 = vmatmul.f32.gmra.mxu0 %v383
        %v521 = vpop.f32.mrf.mxu0
        %v522 = vadd.f32 %v433, %v521
        %523 = vmatmul.f32.gmra.mxu0 %v384
        %v524 = vpop.f32.mrf.mxu0
        %v525 = vadd.f32 %v433, %v524
        %526 = vmatmul.f32.gmra.mxu0 %v385
        %v527 = vpop.f32.mrf.mxu0
        %v528 = vadd.f32 %v433, %v527
        %529 = vmatmul.f32.gmra.mxu0 %v386
        %v530 = vpop.f32.mrf.mxu0
        %v531 = vadd.f32 %v433, %v530
        %532 = vmatmul.f32.gmra.mxu0 %v387
        %v533 = vpop.f32.mrf.mxu0
        %v534 = vadd.f32 %v433, %v533
        %535 = vmatmul.f32.gmra.mxu0 %v388
        %v536 = vpop.f32.mrf.mxu0
        %v537 = vadd.f32 %v433, %v536
        %538 = vmatmul.f32.gmra.mxu0 %v389
        %v539 = vpop.f32.mrf.mxu0
        %v540 = vadd.f32 %v433, %v539
        %541 = vmatmul.f32.gmra.mxu0 %v390
        %v542 = vpop.f32.mrf.mxu0
        %v543 = vadd.f32 %v433, %v542
        %544 = vmatmul.f32.gmra.mxu0 %v391
        %v545 = vpop.f32.mrf.mxu0
        %v546 = vadd.f32 %v433, %v545
        %547 = vmatmul.f32.gmra.mxu0 %v392
        %v548 = vpop.f32.mrf.mxu0
        %v549 = vadd.f32 %v433, %v548
        %550 = vmatmul.f32.gmra.mxu0 %v393
        %v551 = vpop.f32.mrf.mxu0
        %v552 = vadd.f32 %v433, %v551
        %553 = vmatmul.f32.gmra.mxu0 %v394
        %v554 = vpop.f32.mrf.mxu0
        %v555 = vadd.f32 %v433, %v554
        %556 = vmatmul.f32.gmra.mxu0 %v395
        %v557 = vpop.f32.mrf.mxu0
        %v558 = vadd.f32 %v433, %v557
        %559 = vmatmul.f32.gmra.mxu0 %v396
        %v560 = vpop.f32.mrf.mxu0
        %v561 = vadd.f32 %v433, %v560
        %562 = vmatmul.f32.gmra.mxu0 %v397
        %v563 = vpop.f32.mrf.mxu0
        %v564 = vadd.f32 %v433, %v563
        %565 = vdwg.mxu0
        %v566 = vxor.u32 %v454, 2147483648
        %v567 = vxor.u32 %v519, 2147483648
        %v568 = vxor.u32 %v457, 2147483648
        %v569 = vxor.u32 %v522, 2147483648
        %v570 = vxor.u32 %v460, 2147483648
        %v571 = vxor.u32 %v525, 2147483648
        %v572 = vxor.u32 %v463, 2147483648
        %v573 = vxor.u32 %v528, 2147483648
        %v574 = vxor.u32 %v466, 2147483648
        %v575 = vxor.u32 %v531, 2147483648
        %v576 = vxor.u32 %v469, 2147483648
        %v577 = vxor.u32 %v534, 2147483648
        %v578 = vxor.u32 %v472, 2147483648
        %v579 = vxor.u32 %v537, 2147483648
        %v580 = vxor.u32 %v475, 2147483648
        %v581 = vxor.u32 %v540, 2147483648
        %v582 = vxor.u32 %v478, 2147483648
        %v583 = vxor.u32 %v543, 2147483648
        %v584 = vxor.u32 %v481, 2147483648
        %v585 = vxor.u32 %v546, 2147483648
        %v586 = vxor.u32 %v484, 2147483648
        %v587 = vxor.u32 %v549, 2147483648
        %v588 = vxor.u32 %v487, 2147483648
        %v589 = vxor.u32 %v552, 2147483648
        %v590 = vxor.u32 %v490, 2147483648
        %v591 = vxor.u32 %v555, 2147483648
        %v592 = vxor.u32 %v493, 2147483648
        %v593 = vxor.u32 %v558, 2147483648
        %v594 = vxor.u32 %v496, 2147483648
        %v595 = vxor.u32 %v561, 2147483648
        %v596 = vxor.u32 %v499, 2147483648
        %v597 = vxor.u32 %v564, 2147483648
        %v598 = vmul.f32 %v566, 1.442695
        %v599 = vpow.pop %v598
        %v600 = vmul.f32 %v567, 1.442695
        %v601 = vpow.pop %v600
        %v602 = vmul.f32 %v568, 1.442695
        %v603 = vpow.pop %v602
        %v604 = vmul.f32 %v569, 1.442695
        %v605 = vpow.pop %v604
        %v606 = vmul.f32 %v570, 1.442695
        %v607 = vpow.pop %v606
        %v608 = vmul.f32 %v571, 1.442695
        %v609 = vpow.pop %v608
        %v610 = vmul.f32 %v572, 1.442695
        %v611 = vpow.pop %v610
        %v612 = vmul.f32 %v573, 1.442695
        %v613 = vpow.pop %v612
        %v614 = vmul.f32 %v574, 1.442695
        %v615 = vpow.pop %v614
        %v616 = vmul.f32 %v575, 1.442695
        %v617 = vpow.pop %v616
        %v618 = vmul.f32 %v576, 1.442695
        %v619 = vpow.pop %v618
        %v620 = vmul.f32 %v577, 1.442695
        %v621 = vpow.pop %v620
        %v622 = vmul.f32 %v578, 1.442695
        %v623 = vpow.pop %v622
        %v624 = vmul.f32 %v579, 1.442695
        %v625 = vpow.pop %v624
        %v626 = vmul.f32 %v580, 1.442695
        %v627 = vpow.pop %v626
        %v628 = vmul.f32 %v581, 1.442695
        %v629 = vpow.pop %v628
        %v630 = vmul.f32 %v582, 1.442695
        %v631 = vpow.pop %v630
        %v632 = vmul.f32 %v583, 1.442695
        %v633 = vpow.pop %v632
        %v634 = vmul.f32 %v584, 1.442695
        %v635 = vpow.pop %v634
        %v636 = vmul.f32 %v585, 1.442695
        %v637 = vpow.pop %v636
        %v638 = vmul.f32 %v586, 1.442695
        %v639 = vpow.pop %v638
        %v640 = vmul.f32 %v587, 1.442695
        %v641 = vpow.pop %v640
        %v642 = vmul.f32 %v588, 1.442695
        %v643 = vpow.pop %v642
        %v644 = vmul.f32 %v589, 1.442695
        %v645 = vpow.pop %v644
        %v646 = vmul.f32 %v590, 1.442695
        %v647 = vpow.pop %v646
        %v648 = vmul.f32 %v591, 1.442695
        %v649 = vpow.pop %v648
        %v650 = vmul.f32 %v592, 1.442695
        %v651 = vpow.pop %v650
        %v652 = vmul.f32 %v593, 1.442695
        %v653 = vpow.pop %v652
        %v654 = vmul.f32 %v594, 1.442695
        %v655 = vpow.pop %v654
        %v656 = vmul.f32 %v595, 1.442695
        %v657 = vpow.pop %v656
        %v658 = vmul.f32 %v596, 1.442695
        %v659 = vpow.pop %v658
        %v660 = vmul.f32 %v597, 1.442695
        %v661 = vpow.pop %v660
        %v662 = vadd.f32 %v599, 1.0
        %v663 = vadd.f32 %v601, 1.0
        %v664 = vadd.f32 %v603, 1.0
        %v665 = vadd.f32 %v605, 1.0
        %v666 = vadd.f32 %v607, 1.0
        %v667 = vadd.f32 %v609, 1.0
        %v668 = vadd.f32 %v611, 1.0
        %v669 = vadd.f32 %v613, 1.0
        %v670 = vadd.f32 %v615, 1.0
        %v671 = vadd.f32 %v617, 1.0
        %v672 = vadd.f32 %v619, 1.0
        %v673 = vadd.f32 %v621, 1.0
        %v674 = vadd.f32 %v623, 1.0
        %v675 = vadd.f32 %v625, 1.0
        %v676 = vadd.f32 %v627, 1.0
        %v677 = vadd.f32 %v629, 1.0
        %v678 = vadd.f32 %v631, 1.0
        %v679 = vadd.f32 %v633, 1.0
        %v680 = vadd.f32 %v635, 1.0
        %v681 = vadd.f32 %v637, 1.0
        %v682 = vadd.f32 %v639, 1.0
        %v683 = vadd.f32 %v641, 1.0
        %v684 = vadd.f32 %v643, 1.0
        %v685 = vadd.f32 %v645, 1.0
        %v686 = vadd.f32 %v647, 1.0
        %v687 = vadd.f32 %v649, 1.0
        %v688 = vadd.f32 %v651, 1.0
        %v689 = vadd.f32 %v653, 1.0
        %v690 = vadd.f32 %v655, 1.0
        %v691 = vadd.f32 %v657, 1.0
        %v692 = vadd.f32 %v659, 1.0
        %v693 = vadd.f32 %v661, 1.0
        %v694 = vrcp.pop %v662
        %v695 = vmul.f32 %v662, %v694
        %v696 = vsub.f32 1.0, %v695
        %v697 = vmul.f32 %v694, %v696
        %v698 = vadd.f32 %v694, %v697
        %vm699 = vweird.f32 %v662
        %vm700 = vweird.f32 %v694
        %vm701 = vmor %vm699, %vm700
        %v702 = vsel %vm701, %v694, %v698
        %v703 = vand.u32 2147483647, %v662
        %vm704 = vcmp.eq.f32.partialorder %v703, 8.507059e+37
        %v705 = vand.u32 %v662, 2147483648
        %v706 = vor.u32 1.1754944e-38, %v705
        %v707 = vsel %vm704, %v706, %v702
        %v708 = vmul.f32 1.0, %v707
        %v709 = vrcp.pop %v663
        %v710 = vmul.f32 %v663, %v709
        %v711 = vsub.f32 1.0, %v710
        %v712 = vmul.f32 %v709, %v711
        %v713 = vadd.f32 %v709, %v712
        %vm714 = vweird.f32 %v663
        %vm715 = vweird.f32 %v709
        %vm716 = vmor %vm714, %vm715
        %v717 = vsel %vm716, %v709, %v713
        %v718 = vand.u32 2147483647, %v663
        %vm719 = vcmp.eq.f32.partialorder %v718, 8.507059e+37
        %v720 = vand.u32 %v663, 2147483648
        %v721 = vor.u32 1.1754944e-38, %v720
        %v722 = vsel %vm719, %v721, %v717
        %v723 = vmul.f32 1.0, %v722
        %v724 = vrcp.pop %v664
        %v725 = vmul.f32 %v664, %v724
        %v726 = vsub.f32 1.0, %v725
        %v727 = vmul.f32 %v724, %v726
        %v728 = vadd.f32 %v724, %v727
        %vm729 = vweird.f32 %v664
        %vm730 = vweird.f32 %v724
        %vm731 = vmor %vm729, %vm730
        %v732 = vsel %vm731, %v724, %v728
        %v733 = vand.u32 2147483647, %v664
        %vm734 = vcmp.eq.f32.partialorder %v733, 8.507059e+37
        %v735 = vand.u32 %v664, 2147483648
        %v736 = vor.u32 1.1754944e-38, %v735
        %v737 = vsel %vm734, %v736, %v732
        %v738 = vmul.f32 1.0, %v737
        %v739 = vrcp.pop %v665
        %v740 = vmul.f32 %v665, %v739
        %v741 = vsub.f32 1.0, %v740
        %v742 = vmul.f32 %v739, %v741
        %v743 = vadd.f32 %v739, %v742
        %vm744 = vweird.f32 %v665
        %vm745 = vweird.f32 %v739
        %vm746 = vmor %vm744, %vm745
        %v747 = vsel %vm746, %v739, %v743
        %v748 = vand.u32 2147483647, %v665
        %vm749 = vcmp.eq.f32.partialorder %v748, 8.507059e+37
        %v750 = vand.u32 %v665, 2147483648
        %v751 = vor.u32 1.1754944e-38, %v750
        %v752 = vsel %vm749, %v751, %v747
        %v753 = vmul.f32 1.0, %v752
        %v754 = vrcp.pop %v666
        %v755 = vmul.f32 %v666, %v754
        %v756 = vsub.f32 1.0, %v755
        %v757 = vmul.f32 %v754, %v756
        %v758 = vadd.f32 %v754, %v757
        %vm759 = vweird.f32 %v666
        %vm760 = vweird.f32 %v754
        %vm761 = vmor %vm759, %vm760
        %v762 = vsel %vm761, %v754, %v758
        %v763 = vand.u32 2147483647, %v666
        %vm764 = vcmp.eq.f32.partialorder %v763, 8.507059e+37
        %v765 = vand.u32 %v666, 2147483648
        %v766 = vor.u32 1.1754944e-38, %v765
        %v767 = vsel %vm764, %v766, %v762
        %v768 = vmul.f32 1.0, %v767
        %v769 = vrcp.pop %v667
        %v770 = vmul.f32 %v667, %v769
        %v771 = vsub.f32 1.0, %v770
        %v772 = vmul.f32 %v769, %v771
        %v773 = vadd.f32 %v769, %v772
        %vm774 = vweird.f32 %v667
        %vm775 = vweird.f32 %v769
        %vm776 = vmor %vm774, %vm775
        %v777 = vsel %vm776, %v769, %v773
        %v778 = vand.u32 2147483647, %v667
        %vm779 = vcmp.eq.f32.partialorder %v778, 8.507059e+37
        %v780 = vand.u32 %v667, 2147483648
        %v781 = vor.u32 1.1754944e-38, %v780
        %v782 = vsel %vm779, %v781, %v777
        %v783 = vmul.f32 1.0, %v782
        %v784 = vrcp.pop %v668
        %v785 = vmul.f32 %v668, %v784
        %v786 = vsub.f32 1.0, %v785
        %v787 = vmul.f32 %v784, %v786
        %v788 = vadd.f32 %v784, %v787
        %vm789 = vweird.f32 %v668
        %vm790 = vweird.f32 %v784
        %vm791 = vmor %vm789, %vm790
        %v792 = vsel %vm791, %v784, %v788
        %v793 = vand.u32 2147483647, %v668
        %vm794 = vcmp.eq.f32.partialorder %v793, 8.507059e+37
        %v795 = vand.u32 %v668, 2147483648
        %v796 = vor.u32 1.1754944e-38, %v795
        %v797 = vsel %vm794, %v796, %v792
        %v798 = vmul.f32 1.0, %v797
        %v799 = vrcp.pop %v669
        %v800 = vmul.f32 %v669, %v799
        %v801 = vsub.f32 1.0, %v800
        %v802 = vmul.f32 %v799, %v801
        %v803 = vadd.f32 %v799, %v802
        %vm804 = vweird.f32 %v669
        %vm805 = vweird.f32 %v799
        %vm806 = vmor %vm804, %vm805
        %v807 = vsel %vm806, %v799, %v803
        %v808 = vand.u32 2147483647, %v669
        %vm809 = vcmp.eq.f32.partialorder %v808, 8.507059e+37
        %v810 = vand.u32 %v669, 2147483648
        %v811 = vor.u32 1.1754944e-38, %v810
        %v812 = vsel %vm809, %v811, %v807
        %v813 = vmul.f32 1.0, %v812
        %v814 = vrcp.pop %v670
        %v815 = vmul.f32 %v670, %v814
        %v816 = vsub.f32 1.0, %v815
        %v817 = vmul.f32 %v814, %v816
        %v818 = vadd.f32 %v814, %v817
        %vm819 = vweird.f32 %v670
        %vm820 = vweird.f32 %v814
        %vm821 = vmor %vm819, %vm820
        %v822 = vsel %vm821, %v814, %v818
        %v823 = vand.u32 2147483647, %v670
        %vm824 = vcmp.eq.f32.partialorder %v823, 8.507059e+37
        %v825 = vand.u32 %v670, 2147483648
        %v826 = vor.u32 1.1754944e-38, %v825
        %v827 = vsel %vm824, %v826, %v822
        %v828 = vmul.f32 1.0, %v827
        %v829 = vrcp.pop %v671
        %v830 = vmul.f32 %v671, %v829
        %v831 = vsub.f32 1.0, %v830
        %v832 = vmul.f32 %v829, %v831
        %v833 = vadd.f32 %v829, %v832
        %vm834 = vweird.f32 %v671
        %vm835 = vweird.f32 %v829
        %vm836 = vmor %vm834, %vm835
        %v837 = vsel %vm836, %v829, %v833
        %v838 = vand.u32 2147483647, %v671
        %vm839 = vcmp.eq.f32.partialorder %v838, 8.507059e+37
        %v840 = vand.u32 %v671, 2147483648
        %v841 = vor.u32 1.1754944e-38, %v840
        %v842 = vsel %vm839, %v841, %v837
        %v843 = vmul.f32 1.0, %v842
        %v844 = vrcp.pop %v672
        %v845 = vmul.f32 %v672, %v844
        %v846 = vsub.f32 1.0, %v845
        %v847 = vmul.f32 %v844, %v846
        %v848 = vadd.f32 %v844, %v847
        %vm849 = vweird.f32 %v672
        %vm850 = vweird.f32 %v844
        %vm851 = vmor %vm849, %vm850
        %v852 = vsel %vm851, %v844, %v848
        %v853 = vand.u32 2147483647, %v672
        %vm854 = vcmp.eq.f32.partialorder %v853, 8.507059e+37
        %v855 = vand.u32 %v672, 2147483648
        %v856 = vor.u32 1.1754944e-38, %v855
        %v857 = vsel %vm854, %v856, %v852
        %v858 = vmul.f32 1.0, %v857
        %v859 = vrcp.pop %v673
        %v860 = vmul.f32 %v673, %v859
        %v861 = vsub.f32 1.0, %v860
        %v862 = vmul.f32 %v859, %v861
        %v863 = vadd.f32 %v859, %v862
        %vm864 = vweird.f32 %v673
        %vm865 = vweird.f32 %v859
        %vm866 = vmor %vm864, %vm865
        %v867 = vsel %vm866, %v859, %v863
        %v868 = vand.u32 2147483647, %v673
        %vm869 = vcmp.eq.f32.partialorder %v868, 8.507059e+37
        %v870 = vand.u32 %v673, 2147483648
        %v871 = vor.u32 1.1754944e-38, %v870
        %v872 = vsel %vm869, %v871, %v867
        %v873 = vmul.f32 1.0, %v872
        %v874 = vrcp.pop %v674
        %v875 = vmul.f32 %v674, %v874
        %v876 = vsub.f32 1.0, %v875
        %v877 = vmul.f32 %v874, %v876
        %v878 = vadd.f32 %v874, %v877
        %vm879 = vweird.f32 %v674
        %vm880 = vweird.f32 %v874
        %vm881 = vmor %vm879, %vm880
        %v882 = vsel %vm881, %v874, %v878
        %v883 = vand.u32 2147483647, %v674
        %vm884 = vcmp.eq.f32.partialorder %v883, 8.507059e+37
        %v885 = vand.u32 %v674, 2147483648
        %v886 = vor.u32 1.1754944e-38, %v885
        %v887 = vsel %vm884, %v886, %v882
        %v888 = vmul.f32 1.0, %v887
        %v889 = vrcp.pop %v675
        %v890 = vmul.f32 %v675, %v889
        %v891 = vsub.f32 1.0, %v890
        %v892 = vmul.f32 %v889, %v891
        %v893 = vadd.f32 %v889, %v892
        %vm894 = vweird.f32 %v675
        %vm895 = vweird.f32 %v889
        %vm896 = vmor %vm894, %vm895
        %v897 = vsel %vm896, %v889, %v893
        %v898 = vand.u32 2147483647, %v675
        %vm899 = vcmp.eq.f32.partialorder %v898, 8.507059e+37
        %v900 = vand.u32 %v675, 2147483648
        %v901 = vor.u32 1.1754944e-38, %v900
        %v902 = vsel %vm899, %v901, %v897
        %v903 = vmul.f32 1.0, %v902
        %v904 = vrcp.pop %v676
        %v905 = vmul.f32 %v676, %v904
        %v906 = vsub.f32 1.0, %v905
        %v907 = vmul.f32 %v904, %v906
        %v908 = vadd.f32 %v904, %v907
        %vm909 = vweird.f32 %v676
        %vm910 = vweird.f32 %v904
        %vm911 = vmor %vm909, %vm910
        %v912 = vsel %vm911, %v904, %v908
        %v913 = vand.u32 2147483647, %v676
        %vm914 = vcmp.eq.f32.partialorder %v913, 8.507059e+37
        %v915 = vand.u32 %v676, 2147483648
        %v916 = vor.u32 1.1754944e-38, %v915
        %v917 = vsel %vm914, %v916, %v912
        %v918 = vmul.f32 1.0, %v917
        %v919 = vrcp.pop %v677
        %v920 = vmul.f32 %v677, %v919
        %v921 = vsub.f32 1.0, %v920
        %v922 = vmul.f32 %v919, %v921
        %v923 = vadd.f32 %v919, %v922
        %vm924 = vweird.f32 %v677
        %vm925 = vweird.f32 %v919
        %vm926 = vmor %vm924, %vm925
        %v927 = vsel %vm926, %v919, %v923
        %v928 = vand.u32 2147483647, %v677
        %vm929 = vcmp.eq.f32.partialorder %v928, 8.507059e+37
        %v930 = vand.u32 %v677, 2147483648
        %v931 = vor.u32 1.1754944e-38, %v930
        %v932 = vsel %vm929, %v931, %v927
        %v933 = vmul.f32 1.0, %v932
        %v934 = vrcp.pop %v678
        %v935 = vmul.f32 %v678, %v934
        %v936 = vsub.f32 1.0, %v935
        %v937 = vmul.f32 %v934, %v936
        %v938 = vadd.f32 %v934, %v937
        %vm939 = vweird.f32 %v678
        %vm940 = vweird.f32 %v934
        %vm941 = vmor %vm939, %vm940
        %v942 = vsel %vm941, %v934, %v938
        %v943 = vand.u32 2147483647, %v678
        %vm944 = vcmp.eq.f32.partialorder %v943, 8.507059e+37
        %v945 = vand.u32 %v678, 2147483648
        %v946 = vor.u32 1.1754944e-38, %v945
        %v947 = vsel %vm944, %v946, %v942
        %v948 = vmul.f32 1.0, %v947
        %v949 = vrcp.pop %v679
        %v950 = vmul.f32 %v679, %v949
        %v951 = vsub.f32 1.0, %v950
        %v952 = vmul.f32 %v949, %v951
        %v953 = vadd.f32 %v949, %v952
        %vm954 = vweird.f32 %v679
        %vm955 = vweird.f32 %v949
        %vm956 = vmor %vm954, %vm955
        %v957 = vsel %vm956, %v949, %v953
        %v958 = vand.u32 2147483647, %v679
        %vm959 = vcmp.eq.f32.partialorder %v958, 8.507059e+37
        %v960 = vand.u32 %v679, 2147483648
        %v961 = vor.u32 1.1754944e-38, %v960
        %v962 = vsel %vm959, %v961, %v957
        %v963 = vmul.f32 1.0, %v962
        %v964 = vrcp.pop %v680
        %v965 = vmul.f32 %v680, %v964
        %v966 = vsub.f32 1.0, %v965
        %v967 = vmul.f32 %v964, %v966
        %v968 = vadd.f32 %v964, %v967
        %vm969 = vweird.f32 %v680
        %vm970 = vweird.f32 %v964
        %vm971 = vmor %vm969, %vm970
        %v972 = vsel %vm971, %v964, %v968
        %v973 = vand.u32 2147483647, %v680
        %vm974 = vcmp.eq.f32.partialorder %v973, 8.507059e+37
        %v975 = vand.u32 %v680, 2147483648
        %v976 = vor.u32 1.1754944e-38, %v975
        %v977 = vsel %vm974, %v976, %v972
        %v978 = vmul.f32 1.0, %v977
        %v979 = vrcp.pop %v681
        %v980 = vmul.f32 %v681, %v979
        %v981 = vsub.f32 1.0, %v980
        %v982 = vmul.f32 %v979, %v981
        %v983 = vadd.f32 %v979, %v982
        %vm984 = vweird.f32 %v681
        %vm985 = vweird.f32 %v979
        %vm986 = vmor %vm984, %vm985
        %v987 = vsel %vm986, %v979, %v983
        %v988 = vand.u32 2147483647, %v681
        %vm989 = vcmp.eq.f32.partialorder %v988, 8.507059e+37
        %v990 = vand.u32 %v681, 2147483648
        %v991 = vor.u32 1.1754944e-38, %v990
        %v992 = vsel %vm989, %v991, %v987
        %v993 = vmul.f32 1.0, %v992
        %v994 = vrcp.pop %v682
        %v995 = vmul.f32 %v682, %v994
        %v996 = vsub.f32 1.0, %v995
        %v997 = vmul.f32 %v994, %v996
        %v998 = vadd.f32 %v994, %v997
        %vm999 = vweird.f32 %v682
        %vm1000 = vweird.f32 %v994
        %vm1001 = vmor %vm999, %vm1000
        %v1002 = vsel %vm1001, %v994, %v998
        %v1003 = vand.u32 2147483647, %v682
        %vm1004 = vcmp.eq.f32.partialorder %v1003, 8.507059e+37
        %v1005 = vand.u32 %v682, 2147483648
        %v1006 = vor.u32 1.1754944e-38, %v1005
        %v1007 = vsel %vm1004, %v1006, %v1002
        %v1008 = vmul.f32 1.0, %v1007
        %v1009 = vrcp.pop %v683
        %v1010 = vmul.f32 %v683, %v1009
        %v1011 = vsub.f32 1.0, %v1010
        %v1012 = vmul.f32 %v1009, %v1011
        %v1013 = vadd.f32 %v1009, %v1012
        %vm1014 = vweird.f32 %v683
        %vm1015 = vweird.f32 %v1009
        %vm1016 = vmor %vm1014, %vm1015
        %v1017 = vsel %vm1016, %v1009, %v1013
        %v1018 = vand.u32 2147483647, %v683
        %vm1019 = vcmp.eq.f32.partialorder %v1018, 8.507059e+37
        %v1020 = vand.u32 %v683, 2147483648
        %v1021 = vor.u32 1.1754944e-38, %v1020
        %v1022 = vsel %vm1019, %v1021, %v1017
        %v1023 = vmul.f32 1.0, %v1022
        %v1024 = vrcp.pop %v684
        %v1025 = vmul.f32 %v684, %v1024
        %v1026 = vsub.f32 1.0, %v1025
        %v1027 = vmul.f32 %v1024, %v1026
        %v1028 = vadd.f32 %v1024, %v1027
        %vm1029 = vweird.f32 %v684
        %vm1030 = vweird.f32 %v1024
        %vm1031 = vmor %vm1029, %vm1030
        %v1032 = vsel %vm1031, %v1024, %v1028
        %v1033 = vand.u32 2147483647, %v684
        %vm1034 = vcmp.eq.f32.partialorder %v1033, 8.507059e+37
        %v1035 = vand.u32 %v684, 2147483648
        %v1036 = vor.u32 1.1754944e-38, %v1035
        %v1037 = vsel %vm1034, %v1036, %v1032
        %v1038 = vmul.f32 1.0, %v1037
        %v1039 = vrcp.pop %v685
        %v1040 = vmul.f32 %v685, %v1039
        %v1041 = vsub.f32 1.0, %v1040
        %v1042 = vmul.f32 %v1039, %v1041
        %v1043 = vadd.f32 %v1039, %v1042
        %vm1044 = vweird.f32 %v685
        %vm1045 = vweird.f32 %v1039
        %vm1046 = vmor %vm1044, %vm1045
        %v1047 = vsel %vm1046, %v1039, %v1043
        %v1048 = vand.u32 2147483647, %v685
        %vm1049 = vcmp.eq.f32.partialorder %v1048, 8.507059e+37
        %v1050 = vand.u32 %v685, 2147483648
        %v1051 = vor.u32 1.1754944e-38, %v1050
        %v1052 = vsel %vm1049, %v1051, %v1047
        %v1053 = vmul.f32 1.0, %v1052
        %v1054 = vrcp.pop %v686
        %v1055 = vmul.f32 %v686, %v1054
        %v1056 = vsub.f32 1.0, %v1055
        %v1057 = vmul.f32 %v1054, %v1056
        %v1058 = vadd.f32 %v1054, %v1057
        %vm1059 = vweird.f32 %v686
        %vm1060 = vweird.f32 %v1054
        %vm1061 = vmor %vm1059, %vm1060
        %v1062 = vsel %vm1061, %v1054, %v1058
        %v1063 = vand.u32 2147483647, %v686
        %vm1064 = vcmp.eq.f32.partialorder %v1063, 8.507059e+37
        %v1065 = vand.u32 %v686, 2147483648
        %v1066 = vor.u32 1.1754944e-38, %v1065
        %v1067 = vsel %vm1064, %v1066, %v1062
        %v1068 = vmul.f32 1.0, %v1067
        %v1069 = vrcp.pop %v687
        %v1070 = vmul.f32 %v687, %v1069
        %v1071 = vsub.f32 1.0, %v1070
        %v1072 = vmul.f32 %v1069, %v1071
        %v1073 = vadd.f32 %v1069, %v1072
        %vm1074 = vweird.f32 %v687
        %vm1075 = vweird.f32 %v1069
        %vm1076 = vmor %vm1074, %vm1075
        %v1077 = vsel %vm1076, %v1069, %v1073
        %v1078 = vand.u32 2147483647, %v687
        %vm1079 = vcmp.eq.f32.partialorder %v1078, 8.507059e+37
        %v1080 = vand.u32 %v687, 2147483648
        %v1081 = vor.u32 1.1754944e-38, %v1080
        %v1082 = vsel %vm1079, %v1081, %v1077
        %v1083 = vmul.f32 1.0, %v1082
        %v1084 = vrcp.pop %v688
        %v1085 = vmul.f32 %v688, %v1084
        %v1086 = vsub.f32 1.0, %v1085
        %v1087 = vmul.f32 %v1084, %v1086
        %v1088 = vadd.f32 %v1084, %v1087
        %vm1089 = vweird.f32 %v688
        %vm1090 = vweird.f32 %v1084
        %vm1091 = vmor %vm1089, %vm1090
        %v1092 = vsel %vm1091, %v1084, %v1088
        %v1093 = vand.u32 2147483647, %v688
        %vm1094 = vcmp.eq.f32.partialorder %v1093, 8.507059e+37
        %v1095 = vand.u32 %v688, 2147483648
        %v1096 = vor.u32 1.1754944e-38, %v1095
        %v1097 = vsel %vm1094, %v1096, %v1092
        %v1098 = vmul.f32 1.0, %v1097
        %v1099 = vrcp.pop %v689
        %v1100 = vmul.f32 %v689, %v1099
        %v1101 = vsub.f32 1.0, %v1100
        %v1102 = vmul.f32 %v1099, %v1101
        %v1103 = vadd.f32 %v1099, %v1102
        %vm1104 = vweird.f32 %v689
        %vm1105 = vweird.f32 %v1099
        %vm1106 = vmor %vm1104, %vm1105
        %v1107 = vsel %vm1106, %v1099, %v1103
        %v1108 = vand.u32 2147483647, %v689
        %vm1109 = vcmp.eq.f32.partialorder %v1108, 8.507059e+37
        %v1110 = vand.u32 %v689, 2147483648
        %v1111 = vor.u32 1.1754944e-38, %v1110
        %v1112 = vsel %vm1109, %v1111, %v1107
        %v1113 = vmul.f32 1.0, %v1112
        %v1114 = vrcp.pop %v690
        %v1115 = vmul.f32 %v690, %v1114
        %v1116 = vsub.f32 1.0, %v1115
        %v1117 = vmul.f32 %v1114, %v1116
        %v1118 = vadd.f32 %v1114, %v1117
        %vm1119 = vweird.f32 %v690
        %vm1120 = vweird.f32 %v1114
        %vm1121 = vmor %vm1119, %vm1120
        %v1122 = vsel %vm1121, %v1114, %v1118
        %v1123 = vand.u32 2147483647, %v690
        %vm1124 = vcmp.eq.f32.partialorder %v1123, 8.507059e+37
        %v1125 = vand.u32 %v690, 2147483648
        %v1126 = vor.u32 1.1754944e-38, %v1125
        %v1127 = vsel %vm1124, %v1126, %v1122
        %v1128 = vmul.f32 1.0, %v1127
        %v1129 = vrcp.pop %v691
        %v1130 = vmul.f32 %v691, %v1129
        %v1131 = vsub.f32 1.0, %v1130
        %v1132 = vmul.f32 %v1129, %v1131
        %v1133 = vadd.f32 %v1129, %v1132
        %vm1134 = vweird.f32 %v691
        %vm1135 = vweird.f32 %v1129
        %vm1136 = vmor %vm1134, %vm1135
        %v1137 = vsel %vm1136, %v1129, %v1133
        %v1138 = vand.u32 2147483647, %v691
        %vm1139 = vcmp.eq.f32.partialorder %v1138, 8.507059e+37
        %v1140 = vand.u32 %v691, 2147483648
        %v1141 = vor.u32 1.1754944e-38, %v1140
        %v1142 = vsel %vm1139, %v1141, %v1137
        %v1143 = vmul.f32 1.0, %v1142
        %v1144 = vrcp.pop %v692
        %v1145 = vmul.f32 %v692, %v1144
        %v1146 = vsub.f32 1.0, %v1145
        %v1147 = vmul.f32 %v1144, %v1146
        %v1148 = vadd.f32 %v1144, %v1147
        %vm1149 = vweird.f32 %v692
        %vm1150 = vweird.f32 %v1144
        %vm1151 = vmor %vm1149, %vm1150
        %v1152 = vsel %vm1151, %v1144, %v1148
        %v1153 = vand.u32 2147483647, %v692
        %vm1154 = vcmp.eq.f32.partialorder %v1153, 8.507059e+37
        %v1155 = vand.u32 %v692, 2147483648
        %v1156 = vor.u32 1.1754944e-38, %v1155
        %v1157 = vsel %vm1154, %v1156, %v1152
        %v1158 = vmul.f32 1.0, %v1157
        %v1159 = vrcp.pop %v693
        %v1160 = vmul.f32 %v693, %v1159
        %v1161 = vsub.f32 1.0, %v1160
        %v1162 = vmul.f32 %v1159, %v1161
        %v1163 = vadd.f32 %v1159, %v1162
        %vm1164 = vweird.f32 %v693
        %vm1165 = vweird.f32 %v1159
        %vm1166 = vmor %vm1164, %vm1165
        %v1167 = vsel %vm1166, %v1159, %v1163
        %v1168 = vand.u32 2147483647, %v693
        %vm1169 = vcmp.eq.f32.partialorder %v1168, 8.507059e+37
        %v1170 = vand.u32 %v693, 2147483648
        %v1171 = vor.u32 1.1754944e-38, %v1170
        %v1172 = vsel %vm1169, %v1171, %v1167
        %v1173 = vmul.f32 1.0, %v1172
        %v1174 = vmul.f32 %v454, %v708
        %v1175 = vmul.f32 %v519, %v723
        %v1176 = vmul.f32 %v457, %v738
        %v1177 = vmul.f32 %v522, %v753
        %v1178 = vmul.f32 %v460, %v768
        %v1179 = vmul.f32 %v525, %v783
        %v1180 = vmul.f32 %v463, %v798
        %v1181 = vmul.f32 %v528, %v813
        %v1182 = vmul.f32 %v466, %v828
        %v1183 = vmul.f32 %v531, %v843
        %v1184 = vmul.f32 %v469, %v858
        %v1185 = vmul.f32 %v534, %v873
        %v1186 = vmul.f32 %v472, %v888
        %v1187 = vmul.f32 %v537, %v903
        %v1188 = vmul.f32 %v475, %v918
        %v1189 = vmul.f32 %v540, %v933
        %v1190 = vmul.f32 %v478, %v948
        %v1191 = vmul.f32 %v543, %v963
        %v1192 = vmul.f32 %v481, %v978
        %v1193 = vmul.f32 %v546, %v993
        %v1194 = vmul.f32 %v484, %v1008
        %v1195 = vmul.f32 %v549, %v1023
        %v1196 = vmul.f32 %v487, %v1038
        %v1197 = vmul.f32 %v552, %v1053
        %v1198 = vmul.f32 %v490, %v1068
        %v1199 = vmul.f32 %v555, %v1083
        %v1200 = vmul.f32 %v493, %v1098
        %v1201 = vmul.f32 %v558, %v1113
        %v1202 = vmul.f32 %v496, %v1128
        %v1203 = vmul.f32 %v561, %v1143
        %v1204 = vmul.f32 %v499, %v1158
        %v1205 = vmul.f32 %v564, %v1173
        %v1206 = vld [vmem:[%s334] sm:$0xff]
        %v1207 = vld [vmem:[%s334 + $0x8] sm:$0xff]
        %v1208 = vld [vmem:[%s334 + $0x10] sm:$0xff]
        %v1209 = vld [vmem:[%s334 + $0x18] sm:$0xff]
        %v1210 = vld [vmem:[%s334 + $0x20] sm:$0xff]
        %v1211 = vld [vmem:[%s334 + $0x28] sm:$0xff]
        %v1212 = vld [vmem:[%s334 + $0x30] sm:$0xff]
        %v1213 = vld [vmem:[%s334 + $0x38] sm:$0xff]
        %v1214 = vld [vmem:[%s334 + $0x40] sm:$0xff]
        %v1215 = vld [vmem:[%s334 + $0x48] sm:$0xff]
        %v1216 = vld [vmem:[%s334 + $0x50] sm:$0xff]
        %v1217 = vld [vmem:[%s334 + $0x58] sm:$0xff]
        %v1218 = vld [vmem:[%s334 + $0x60] sm:$0xff]
        %v1219 = vld [vmem:[%s334 + $0x68] sm:$0xff]
        %v1220 = vld [vmem:[%s334 + $0x70] sm:$0xff]
        %v1221 = vld [vmem:[%s334 + $0x78] sm:$0xff]
        %v1222 = vld [vmem:[%s334 + $0x80] sm:$0xff]
        %v1223 = vld [vmem:[%s334 + $0x88] sm:$0xff]
        %v1224 = vld [vmem:[%s334 + $0x90] sm:$0xff]
        %v1225 = vld [vmem:[%s334 + $0x98] sm:$0xff]
        %v1226 = vld [vmem:[%s334 + $0xa0] sm:$0xff]
        %v1227 = vld [vmem:[%s334 + $0xa8] sm:$0xff]
        %v1228 = vld [vmem:[%s334 + $0xb0] sm:$0xff]
        %v1229 = vld [vmem:[%s334 + $0xb8] sm:$0xff]
        %v1230 = vld [vmem:[%s334 + $0xc0] sm:$0xff]
        %v1231 = vld [vmem:[%s334 + $0xc8] sm:$0xff]
        %v1232 = vld [vmem:[%s334 + $0xd0] sm:$0xff]
        %v1233 = vld [vmem:[%s334 + $0xd8] sm:$0xff]
        %v1234 = vld [vmem:[%s334 + $0xe0] sm:$0xff]
        %v1235 = vld [vmem:[%s334 + $0xe8] sm:$0xff]
        %v1236 = vld [vmem:[%s334 + $0xf0] sm:$0xff]
        %v1237 = vld [vmem:[%s334 + $0xf8] sm:$0xff]
        %1238 = vmatpush.msra.mxu0 %v1221
        %1239 = vmatpush.msra.mxu0 %v1220
        %1240 = vmatpush.msra.mxu0 %v1219
        %1241 = vmatpush.msra.mxu0 %v1218
        %1242 = vmatpush.msra.mxu0 %v1217
        %1243 = vmatpush.msra.mxu0 %v1216
        %1244 = vmatpush.msra.mxu0 %v1215
        %1245 = vmatpush.msra.mxu0 %v1214
        %1246 = vmatpush.msra.mxu0 %v1213
        %1247 = vmatpush.msra.mxu0 %v1212
        %1248 = vmatpush.msra.mxu0 %v1211
        %1249 = vmatpush.msra.mxu0 %v1210
        %1250 = vmatpush.msra.mxu0 %v1209
        %1251 = vmatpush.msra.mxu0 %v1208
        %1252 = vmatpush.msra.mxu0 %v1207
        %1253 = vmatpush.msra.mxu0 %v1206
        %1254 = vmatmul.f32.gmra.mxu0 %v1174
        %v1255 = vpop.f32.mrf.mxu0
        %v1256 = vadd.f32 0.0, %v1255
        %1257 = vmatmul.f32.gmra.mxu0 %v1176
        %v1258 = vpop.f32.mrf.mxu0
        %v1259 = vadd.f32 0.0, %v1258
        %1260 = vmatmul.f32.gmra.mxu0 %v1178
        %v1261 = vpop.f32.mrf.mxu0
        %v1262 = vadd.f32 0.0, %v1261
        %1263 = vmatmul.f32.gmra.mxu0 %v1180
        %v1264 = vpop.f32.mrf.mxu0
        %v1265 = vadd.f32 0.0, %v1264
        %1266 = vmatmul.f32.gmra.mxu0 %v1182
        %v1267 = vpop.f32.mrf.mxu0
        %v1268 = vadd.f32 0.0, %v1267
        %1269 = vmatmul.f32.gmra.mxu0 %v1184
        %v1270 = vpop.f32.mrf.mxu0
        %v1271 = vadd.f32 0.0, %v1270
        %1272 = vmatmul.f32.gmra.mxu0 %v1186
        %v1273 = vpop.f32.mrf.mxu0
        %v1274 = vadd.f32 0.0, %v1273
        %1275 = vmatmul.f32.gmra.mxu0 %v1188
        %v1276 = vpop.f32.mrf.mxu0
        %v1277 = vadd.f32 0.0, %v1276
        %1278 = vmatmul.f32.gmra.mxu0 %v1190
        %v1279 = vpop.f32.mrf.mxu0
        %v1280 = vadd.f32 0.0, %v1279
        %1281 = vmatmul.f32.gmra.mxu0 %v1192
        %v1282 = vpop.f32.mrf.mxu0
        %v1283 = vadd.f32 0.0, %v1282
        %1284 = vmatmul.f32.gmra.mxu0 %v1194
        %v1285 = vpop.f32.mrf.mxu0
        %v1286 = vadd.f32 0.0, %v1285
        %1287 = vmatmul.f32.gmra.mxu0 %v1196
        %v1288 = vpop.f32.mrf.mxu0
        %v1289 = vadd.f32 0.0, %v1288
        %1290 = vmatmul.f32.gmra.mxu0 %v1198
        %v1291 = vpop.f32.mrf.mxu0
        %v1292 = vadd.f32 0.0, %v1291
        %1293 = vmatmul.f32.gmra.mxu0 %v1200
        %v1294 = vpop.f32.mrf.mxu0
        %v1295 = vadd.f32 0.0, %v1294
        %1296 = vmatmul.f32.gmra.mxu0 %v1202
        %v1297 = vpop.f32.mrf.mxu0
        %v1298 = vadd.f32 0.0, %v1297
        %1299 = vmatmul.f32.gmra.mxu0 %v1204
        %v1300 = vpop.f32.mrf.mxu0
        %v1301 = vadd.f32 0.0, %v1300
        %1302 = vdwg.mxu0
        %1303 = vmatpush.msra.mxu0 %v1237
        %1304 = vmatpush.msra.mxu0 %v1236
        %1305 = vmatpush.msra.mxu0 %v1235
        %1306 = vmatpush.msra.mxu0 %v1234
        %1307 = vmatpush.msra.mxu0 %v1233
        %1308 = vmatpush.msra.mxu0 %v1232
        %1309 = vmatpush.msra.mxu0 %v1231
        %1310 = vmatpush.msra.mxu0 %v1230
        %1311 = vmatpush.msra.mxu0 %v1229
        %1312 = vmatpush.msra.mxu0 %v1228
        %1313 = vmatpush.msra.mxu0 %v1227
        %1314 = vmatpush.msra.mxu0 %v1226
        %1315 = vmatpush.msra.mxu0 %v1225
        %1316 = vmatpush.msra.mxu0 %v1224
        %1317 = vmatpush.msra.mxu0 %v1223
        %1318 = vmatpush.msra.mxu0 %v1222
        %1319 = vmatmul.f32.gmra.mxu0 %v1175
        %v1320 = vpop.f32.mrf.mxu0
        %v1321 = vadd.f32 %v1256, %v1320
        %1322 = vmatmul.f32.gmra.mxu0 %v1177
        %v1323 = vpop.f32.mrf.mxu0
        %v1324 = vadd.f32 %v1259, %v1323
        %1325 = vmatmul.f32.gmra.mxu0 %v1179
        %v1326 = vpop.f32.mrf.mxu0
        %v1327 = vadd.f32 %v1262, %v1326
        %1328 = vmatmul.f32.gmra.mxu0 %v1181
        %v1329 = vpop.f32.mrf.mxu0
        %v1330 = vadd.f32 %v1265, %v1329
        %1331 = vmatmul.f32.gmra.mxu0 %v1183
        %v1332 = vpop.f32.mrf.mxu0
        %v1333 = vadd.f32 %v1268, %v1332
        %1334 = vmatmul.f32.gmra.mxu0 %v1185
        %v1335 = vpop.f32.mrf.mxu0
        %v1336 = vadd.f32 %v1271, %v1335
        %1337 = vmatmul.f32.gmra.mxu0 %v1187
        %v1338 = vpop.f32.mrf.mxu0
        %v1339 = vadd.f32 %v1274, %v1338
        %1340 = vmatmul.f32.gmra.mxu0 %v1189
        %v1341 = vpop.f32.mrf.mxu0
        %v1342 = vadd.f32 %v1277, %v1341
        %1343 = vmatmul.f32.gmra.mxu0 %v1191
        %v1344 = vpop.f32.mrf.mxu0
        %v1345 = vadd.f32 %v1280, %v1344
        %1346 = vmatmul.f32.gmra.mxu0 %v1193
        %v1347 = vpop.f32.mrf.mxu0
        %v1348 = vadd.f32 %v1283, %v1347
        %1349 = vmatmul.f32.gmra.mxu0 %v1195
        %v1350 = vpop.f32.mrf.mxu0
        %v1351 = vadd.f32 %v1286, %v1350
        %1352 = vmatmul.f32.gmra.mxu0 %v1197
        %v1353 = vpop.f32.mrf.mxu0
        %v1354 = vadd.f32 %v1289, %v1353
        %1355 = vmatmul.f32.gmra.mxu0 %v1199
        %v1356 = vpop.f32.mrf.mxu0
        %v1357 = vadd.f32 %v1292, %v1356
        %1358 = vmatmul.f32.gmra.mxu0 %v1201
        %v1359 = vpop.f32.mrf.mxu0
        %v1360 = vadd.f32 %v1295, %v1359
        %1361 = vmatmul.f32.gmra.mxu0 %v1203
        %v1362 = vpop.f32.mrf.mxu0
        %v1363 = vadd.f32 %v1298, %v1362
        %1364 = vmatmul.f32.gmra.mxu0 %v1205
        %v1365 = vpop.f32.mrf.mxu0
        %v1366 = vadd.f32 %v1301, %v1365
        %1367 = vdwg.mxu0
        %p1368 = scmp.eq.s32.totalorder %s33, 0
        // Predicated region
        $region57: #{tpu_custom_call.1} parent=39 // pred_check
          %p1369 = pneg %p1368
        $region58: #{tpu_custom_call.1} parent=39 // pred_check_branch
          %1371 = sbr.rel (%p1369) target = $region60
        $region59: #{tpu_custom_call.1} parent=39 // pred_region
          %1372 = vst [vmem:[#allocation2] sm:$0xff] %v1321
          %1373 = vst [vmem:[#allocation2 + $0x8] sm:$0xff] %v1324
          %1374 = vst [vmem:[#allocation2 + $0x10] sm:$0xff] %v1327
          %1375 = vst [vmem:[#allocation2 + $0x18] sm:$0xff] %v1330
          %1376 = vst [vmem:[#allocation2 + $0x20] sm:$0xff] %v1333
          %1377 = vst [vmem:[#allocation2 + $0x28] sm:$0xff] %v1336
          %1378 = vst [vmem:[#allocation2 + $0x30] sm:$0xff] %v1339
          %1379 = vst [vmem:[#allocation2 + $0x38] sm:$0xff] %v1342
          %1380 = vst [vmem:[#allocation2 + $0x40] sm:$0xff] %v1345
          %1381 = vst [vmem:[#allocation2 + $0x48] sm:$0xff] %v1348
          %1382 = vst [vmem:[#allocation2 + $0x50] sm:$0xff] %v1351
          %1383 = vst [vmem:[#allocation2 + $0x58] sm:$0xff] %v1354
          %1384 = vst [vmem:[#allocation2 + $0x60] sm:$0xff] %v1357
          %1385 = vst [vmem:[#allocation2 + $0x68] sm:$0xff] %v1360
          %1386 = vst [vmem:[#allocation2 + $0x70] sm:$0xff] %v1363
          %1387 = vst [vmem:[#allocation2 + $0x78] sm:$0xff] %v1366
        $region60: #{tpu_custom_call.1} parent=39 // pred_fallthru
          _
        %p1388 = scmp.ne.s32.totalorder %s33, 0
        // Predicated region
        $region61: #{tpu_custom_call.1} parent=39 // pred_check
          %p1389 = pneg %p1388
        $region62: #{tpu_custom_call.1} parent=39 // pred_check_branch
          %1391 = sbr.rel (%p1389) target = $region64
        $region63: #{tpu_custom_call.1} parent=39 // pred_region
          %v1392 = vld [vmem:[#allocation2] sm:$0xff]
          %v1393 = vld [vmem:[#allocation2 + $0x8] sm:$0xff]
          %v1394 = vld [vmem:[#allocation2 + $0x10] sm:$0xff]
          %v1395 = vld [vmem:[#allocation2 + $0x18] sm:$0xff]
          %v1396 = vld [vmem:[#allocation2 + $0x20] sm:$0xff]
          %v1397 = vld [vmem:[#allocation2 + $0x28] sm:$0xff]
          %v1398 = vld [vmem:[#allocation2 + $0x30] sm:$0xff]
          %v1399 = vld [vmem:[#allocation2 + $0x38] sm:$0xff]
          %v1400 = vld [vmem:[#allocation2 + $0x40] sm:$0xff]
          %v1401 = vld [vmem:[#allocation2 + $0x48] sm:$0xff]
          %v1402 = vld [vmem:[#allocation2 + $0x50] sm:$0xff]
          %v1403 = vld [vmem:[#allocation2 + $0x58] sm:$0xff]
          %v1404 = vld [vmem:[#allocation2 + $0x60] sm:$0xff]
          %v1405 = vld [vmem:[#allocation2 + $0x68] sm:$0xff]
          %v1406 = vld [vmem:[#allocation2 + $0x70] sm:$0xff]
          %v1407 = vld [vmem:[#allocation2 + $0x78] sm:$0xff]
          %v1408 = vadd.f32 %v1392, %v1321
          %v1409 = vadd.f32 %v1393, %v1324
          %v1410 = vadd.f32 %v1394, %v1327
          %v1411 = vadd.f32 %v1395, %v1330
          %v1412 = vadd.f32 %v1396, %v1333
          %v1413 = vadd.f32 %v1397, %v1336
          %v1414 = vadd.f32 %v1398, %v1339
          %v1415 = vadd.f32 %v1399, %v1342
          %v1416 = vadd.f32 %v1400, %v1345
          %v1417 = vadd.f32 %v1401, %v1348
          %v1418 = vadd.f32 %v1402, %v1351
          %v1419 = vadd.f32 %v1403, %v1354
          %v1420 = vadd.f32 %v1404, %v1357
          %v1421 = vadd.f32 %v1405, %v1360
          %v1422 = vadd.f32 %v1406, %v1363
          %v1423 = vadd.f32 %v1407, %v1366
          %1424 = vst [vmem:[#allocation2] sm:$0xff] %v1408
          %1425 = vst [vmem:[#allocation2 + $0x8] sm:$0xff] %v1409
          %1426 = vst [vmem:[#allocation2 + $0x10] sm:$0xff] %v1410
          %1427 = vst [vmem:[#allocation2 + $0x18] sm:$0xff] %v1411
          %1428 = vst [vmem:[#allocation2 + $0x20] sm:$0xff] %v1412
          %1429 = vst [vmem:[#allocation2 + $0x28] sm:$0xff] %v1413
          %1430 = vst [vmem:[#allocation2 + $0x30] sm:$0xff] %v1414
          %1431 = vst [vmem:[#allocation2 + $0x38] sm:$0xff] %v1415
          %1432 = vst [vmem:[#allocation2 + $0x40] sm:$0xff] %v1416
          %1433 = vst [vmem:[#allocation2 + $0x48] sm:$0xff] %v1417
          %1434 = vst [vmem:[#allocation2 + $0x50] sm:$0xff] %v1418
          %1435 = vst [vmem:[#allocation2 + $0x58] sm:$0xff] %v1419
          %1436 = vst [vmem:[#allocation2 + $0x60] sm:$0xff] %v1420
          %1437 = vst [vmem:[#allocation2 + $0x68] sm:$0xff] %v1421
          %1438 = vst [vmem:[#allocation2 + $0x70] sm:$0xff] %v1422
          %1439 = vst [vmem:[#allocation2 + $0x78] sm:$0xff] %v1423
        $region64: #{tpu_custom_call.1} parent=39 // pred_fallthru
          _
        %p1440 = scmp.eq.s32.totalorder %s33, 1
        // Predicated region
        $region65: #{tpu_custom_call.1} parent=39 // pred_check
          %p1441 = pneg %p1440
        $region66: #{tpu_custom_call.1} parent=39 // pred_check_branch
          %1443 = sbr.rel (%p1441) target = $region68
        $region67: #{tpu_custom_call.1} parent=39 // pred_region
          %v1444 = vld [vmem:[#allocation2] sm:$0xff]
          %v1445 = vld [vmem:[#allocation2 + $0x8] sm:$0xff]
          %v1446 = vld [vmem:[#allocation2 + $0x10] sm:$0xff]
          %v1447 = vld [vmem:[#allocation2 + $0x18] sm:$0xff]
          %v1448 = vld [vmem:[#allocation2 + $0x20] sm:$0xff]
          %v1449 = vld [vmem:[#allocation2 + $0x28] sm:$0xff]
          %v1450 = vld [vmem:[#allocation2 + $0x30] sm:$0xff]
          %v1451 = vld [vmem:[#allocation2 + $0x38] sm:$0xff]
          %v1452 = vld [vmem:[#allocation2 + $0x40] sm:$0xff]
          %v1453 = vld [vmem:[#allocation2 + $0x48] sm:$0xff]
          %v1454 = vld [vmem:[#allocation2 + $0x50] sm:$0xff]
          %v1455 = vld [vmem:[#allocation2 + $0x58] sm:$0xff]
          %v1456 = vld [vmem:[#allocation2 + $0x60] sm:$0xff]
          %v1457 = vld [vmem:[#allocation2 + $0x68] sm:$0xff]
          %v1458 = vld [vmem:[#allocation2 + $0x70] sm:$0xff]
          %v1459 = vld [vmem:[#allocation2 + $0x78] sm:$0xff]
          %v1460 = vld [vmem:[%s4] sm:$0x1]
          %v1462 = vperm.slane %v1460, 0
          %v1464 = vadd.f32 %v1444, %v1462
          %v1465 = vadd.f32 %v1445, %v1462
          %v1466 = vadd.f32 %v1446, %v1462
          %v1467 = vadd.f32 %v1447, %v1462
          %v1468 = vadd.f32 %v1448, %v1462
          %v1469 = vadd.f32 %v1449, %v1462
          %v1470 = vadd.f32 %v1450, %v1462
          %v1471 = vadd.f32 %v1451, %v1462
          %v1472 = vadd.f32 %v1452, %v1462
          %v1473 = vadd.f32 %v1453, %v1462
          %v1474 = vadd.f32 %v1454, %v1462
          %v1475 = vadd.f32 %v1455, %v1462
          %v1476 = vadd.f32 %v1456, %v1462
          %v1477 = vadd.f32 %v1457, %v1462
          %v1478 = vadd.f32 %v1458, %v1462
          %v1479 = vadd.f32 %v1459, %v1462
          %1480 = vst [vmem:[%s376] sm:$0xff] %v1464
          %1481 = vst [vmem:[%s376 + $0x8] sm:$0xff] %v1465
          %1482 = vst [vmem:[%s376 + $0x10] sm:$0xff] %v1466
          %1483 = vst [vmem:[%s376 + $0x18] sm:$0xff] %v1467
          %1484 = vst [vmem:[%s376 + $0x20] sm:$0xff] %v1468
          %1485 = vst [vmem:[%s376 + $0x28] sm:$0xff] %v1469
          %1486 = vst [vmem:[%s376 + $0x30] sm:$0xff] %v1470
          %1487 = vst [vmem:[%s376 + $0x38] sm:$0xff] %v1471
          %1488 = vst [vmem:[%s376 + $0x40] sm:$0xff] %v1472
          %1489 = vst [vmem:[%s376 + $0x48] sm:$0xff] %v1473
          %1490 = vst [vmem:[%s376 + $0x50] sm:$0xff] %v1474
          %1491 = vst [vmem:[%s376 + $0x58] sm:$0xff] %v1475
          %1492 = vst [vmem:[%s376 + $0x60] sm:$0xff] %v1476
          %1493 = vst [vmem:[%s376 + $0x68] sm:$0xff] %v1477
          %1494 = vst [vmem:[%s376 + $0x70] sm:$0xff] %v1478
          %1495 = vst [vmem:[%s376 + $0x78] sm:$0xff] %v1479
        $region68: #{tpu_custom_call.1} parent=39 // pred_fallthru
          _
        %s1496 = sand.u32 %s173, 1
        %s1497 = scalar_lea.sflag [#allocation5], %s1496
        %s1498 = sand.u32 %s173, 1
        %s1499 = smul.addr %s1498, 128
        %s1500 = scalar_lea.vmem [#allocation11], %s1499
        // Predicated region
        $region69: #{tpu_custom_call.1} parent=39 // pred_check
          %p1501 = pneg %p183
        $region70: #{tpu_custom_call.1} parent=39 // pred_check_branch
          %1503 = sbr.rel (%p1501) target = $region72
        $region71: #{tpu_custom_call.1} parent=39 // pred_region
          %s1504 = smul.u32 16, %s32
          %1506 = vsyncadd %s1497, 0
          %s1507 = smul.addr %s1504, 8
          %s1508 = scalar_lea.hbm %s5, %s1507
          %s1509 = sshll.u32 %s1500, 4
          %s1510 = int_to_ptr.vmem [resolvable:$true] %s1509
          %s1511 = sshll.u32 %s1508, 4
          %s1512 = int_to_ptr.hbm [resolvable:$true] %s1511
          %1517 = dma.vmem_to_hbm [thread:$0]  %s1510, 2048, %s1512, %s1497, 128, 128, 8
        $region72: #{tpu_custom_call.1} parent=39 // pred_fallthru
          _
      $region40: #{tpu_custom_call.1} parent=5 // pred_fallthru
        _
      %p1518 = scmp.le.s32.totalorder 2, %s23
      // Predicated region
      $region73: #{tpu_custom_call.1} parent=5 // pred_check
        %p1519 = pneg %p1518
      $region74: #{tpu_custom_call.1} parent=5 // pred_check_branch
        %1521 = sbr.rel (%p1519) target = $region76
      $region75: #{tpu_custom_call.1} parent=5 // pred_region
        %s1522 = ssub.s32 %s23, 2
        // Predicated region
        $region77: #{tpu_custom_call.1} parent=75 // pred_check
          %p1523 = pneg %p189
        $region78: #{tpu_custom_call.1} parent=75 // pred_check_branch
          %1525 = sbr.rel (%p1523) target = $region80
        $region79: #{tpu_custom_call.1} parent=75 // pred_region
          %s1526 = sand.u32 %s174, 1
          %s1527 = scalar_lea.sflag [#allocation5], %s1526
          %s1528 = sand.u32 %s174, 1
          %s1529 = smul.addr %s1528, 128
          %s1530 = scalar_lea.vmem [#allocation11], %s1529
          %1532 = dma.done %s1527, 2048
        $region80: #{tpu_custom_call.1} parent=75 // pred_fallthru
          _
      $region76: #{tpu_custom_call.1} parent=5 // pred_fallthru
        _
    $region6: #{tpu_custom_call.1} parent=1 // loop_footer
      %s27 = sadd.s32 1, %s23
    $region7: #{tpu_custom_call.1} parent=1 // loop_footer_branch
      %22 = sbr.rel target = $region3
    $region8: #{tpu_custom_call.1} parent=1 // loop_exit
      _
    %1533 = vsyncpa [#allocation4], 1
    %s1534 = scalar_lea.sflag [#allocation4], 1
    %1535 = vsyncpa %s1534, 1
    %1536 = vsyncpa [#allocation7], 1
    %s1537 = scalar_lea.sflag [#allocation7], 1
    %1538 = vsyncpa %s1537, 1
    %1539 = vsyncpa [#allocation10], 1
    %s1540 = scalar_lea.sflag [#allocation10], 1
    %1541 = vsyncpa %s1540, 1
    %1542 = vsyncpa [#allocation5], 1
    %s1543 = scalar_lea.sflag [#allocation5], 1
    %1544 = vsyncpa %s1543, 1

</llo_original>
